<compile_context>
chip_gen: v7x
topology: tpu7x:2x2x1
jax: 0.10.0
libtpu: 0.0.40
codegen_flags: <defaults>
</compile_context>

<pallas_src>
import functools

import jax
import jax.numpy as jnp
from jax.experimental import pallas as pl
from jax.experimental.pallas import tpu as pltpu

K1 = 9          # first conv kernel size  (hp.fft_conv1d_kernel_size[0])
K2 = 1          # second conv kernel size (hp.fft_conv1d_kernel_size[1])
LN_EPS = 1e-5   # PyTorch LayerNorm default
HALO = K1 - 1   # halo rows per tile (pad rows on each side)
PAD = HALO // 2


def _ffn_kernel(x_ref, hl_ref, w1_ref, b1_ref, w2_ref, b2_ref, g_ref, be_ref,
                o_ref, xb_ref, *, tile_t):
    """Fused conv1d(K1) + ReLU + conv1d(1) + residual + LayerNorm on one (batch, time-tile).

    x_ref  : [1, tile_t, d_in]        main activation tile (also the residual)
    hl_ref : [1, 1, K1-1, d_in]       halo rows: PAD rows before + PAD rows after the tile
    w1_ref : [K1, d_in, d_hid]        first-conv taps (MXU dtype)
    b1_ref : [1, d_hid]
    w2_ref : [d_hid, d_in]            pointwise second conv (MXU dtype)
    b2_ref : [1, d_in]
    g_ref  : [1, d_in]                layernorm gamma
    be_ref : [1, d_in]                layernorm beta
    o_ref  : [1, tile_t, d_in]
    xb_ref : [tile_t + 2*HALO, d_in]  VMEM scratch for the stitched haloed window
    """
    cdt = xb_ref.dtype

    # Stitch the haloed window: front halo at rows [PAD, HALO), main tile at the
    # 8-row-aligned offset HALO, back halo right after it.  Rows [0, PAD) and the
    # tail padding rows are never read.
    xb_ref[PAD:HALO, :] = hl_ref[0, 0, 0:PAD, :].astype(cdt)
    xb_ref[HALO:HALO + tile_t, :] = x_ref[0].astype(cdt)
    xb_ref[HALO + tile_t:HALO + tile_t + PAD, :] = hl_ref[0, 0, PAD:HALO, :].astype(cdt)

    xw = xb_ref[...]                         # [tile_t + 2*HALO, d_in], MXU dtype
    w1 = w1_ref[...]                         # [K1, d_in, d_hid],       MXU dtype

    # First conv as K1 shifted matmuls (cross-correlation == nn.Conv1d), f32 accumulate.
    # Tap k of output row i reads scratch row PAD + k + i.
    h = jnp.dot(xw[PAD:PAD + tile_t, :], w1[0], preferred_element_type=jnp.float32)
    for k in range(1, K1):                   # static unroll
        h = h + jnp.dot(xw[PAD + k:PAD + k + tile_t, :], w1[k],
                        preferred_element_type=jnp.float32)
    h = jnp.maximum(h + b1_ref[...].astype(jnp.float32), 0.0)

    # Second conv is pointwise -> single matmul.
    y = jnp.dot(h.astype(w2_ref.dtype), w2_ref[...],
                preferred_element_type=jnp.float32)
    y = y + b2_ref[...].astype(jnp.float32)

    # TODO(synk): dropout implemented as eval-mode identity (p=0.1 only at train time).

    # Residual straight from the already-resident main block, in full precision.
    y = y + x_ref[0].astype(jnp.float32)

    # LayerNorm over channels in f32; centered form, reuse the single subtraction.
    mean = jnp.mean(y, axis=-1, keepdims=True)
    yc = y - mean
    var = jnp.mean(yc * yc, axis=-1, keepdims=True)
    out = yc * jax.lax.rsqrt(var + LN_EPS)
    out = out * g_ref[...].astype(jnp.float32) + be_ref[...].astype(jnp.float32)
    o_ref[0] = out.astype(o_ref.dtype)


@functools.lru_cache(maxsize=1)
def _vmem_capacity_bytes():
    try:
        return int(pltpu.get_tpu_info().vmem_capacity_bytes)
    except Exception:
        return 128 << 20   # conservative fallback (v5e/v6e physical VMEM)


def _resident_spec(shape):
    """Constant-index BlockSpec kept resident; single-buffered where supported."""
    index_map = lambda b, t, _s=shape: (0,) * len(_s)
    try:
        return pl.BlockSpec(shape, index_map, pipeline_mode=pl.Buffered(1))
    except TypeError:   # older jax without pipeline_mode kwarg
        return pl.BlockSpec(shape, index_map)


def positionwise_feed_forward(x, params, *, tile_t=None, mxu_dtype=None):
    """x: [B, T, d_in] (channels-last). params: dict of weights (torch Conv1d layout)."""
    B, T, d_in = x.shape
    w1_t = params["w1"]          # [d_hid, d_in, K1]
    w2_t = params["w2"]          # [d_in, d_hid, K2]
    d_hid = w1_t.shape[0]
    assert w1_t.shape[2] == K1 and K1 % 2 == 1, "K1 must be odd for 'same' padding"
    assert w2_t.shape[2] == K2 == 1, "second conv assumed pointwise (K2 == 1)"

    # MXU feed dtype: never silently run the slow f32 matmul path — default to bf16
    # operands with f32 accumulation; residual and LayerNorm stay in f32.
    if mxu_dtype is None:
        mxu_dtype = jnp.bfloat16 if x.dtype == jnp.dtype(jnp.float32) else x.dtype
    mxu_dtype = jnp.dtype(mxu_dtype)

    # Re-layout conv weights for matmul-per-tap (plain-JAX glue, done once).
    w1 = jnp.transpose(w1_t, (2, 1, 0)).astype(mxu_dtype)        # [K1, d_in, d_hid]
    w2 = jnp.transpose(w2_t[:, :, 0], (1, 0)).astype(mxu_dtype)  # [d_hid, d_in]
    b1 = params["b1"].reshape(1, d_hid)
    b2 = params["b2"].reshape(1, d_in)
    gamma = params["gamma"].reshape(1, d_in)
    beta = params["beta"].reshape(1, d_in)

    # ---- tile-size / VMEM budgeting (per-generation clamp) -----------------
    cap = _vmem_capacity_bytes()
    if tile_t is None:
        tile_t = 1024 if cap >= (100 << 20) else 512   # v5e/v6e: 128 MiB; v7x: 64 MiB
    ceiling = min((cap * 3) // 4, 96 << 20)             # leave DMA/compiler headroom

    in_b = x.dtype.itemsize
    mxu_b = mxu_dtype.itemsize
    w_bytes = sum(int(a.size) * a.dtype.itemsize
                  for a in (w1, w2, b1, b2, gamma, beta))   # single-buffered (Buffered(1))

    def _need(tt):
        act = 2 * tt * d_in * in_b            # main tile, double-buffered
        act += 2 * HALO * d_in * in_b         # halo rows, double-buffered
        act += 2 * tt * d_in * in_b           # output tile, double-buffered
        scratch = (tt + 2 * HALO) * d_in * mxu_b
        interm = tt * d_hid * (4 + mxu_b) + 4 * tt * d_in * 4
        return act + scratch + w_bytes + interm + (4 << 20)

    TT = min(T, tile_t)
    while TT > 128 and _need(TT) > ceiling:   # back off tile size before VMEM blows up
        TT = max(128, TT // 2)
    nT = -(-T // TT)
    T_full = nT * TT
    vmem_limit = int(min(max(_need(TT), 32 << 20), ceiling))

    # ---- inputs: plain blocked main stream + tiny halo stream ---------------
    # Only pad the time axis when T is ragged w.r.t. TT (zero tail matches the
    # conv 'same' padding; padded rows are sliced off at the end).
    x_main = x if T_full == T else jnp.pad(x, ((0, 0), (0, T_full - T), (0, 0)))

    base = jnp.arange(nT, dtype=jnp.int32) * TT
    off = jnp.arange(PAD, dtype=jnp.int32)
    hidx = jnp.concatenate([base[:, None] - PAD + off[None, :],   # rows before each tile
                            base[:, None] + TT + off[None, :]],   # rows after each tile
                           axis=1)                                # [nT, 2*PAD]
    hvalid = (hidx >= 0) & (hidx < T)
    halo_rows = jnp.take(x, jnp.clip(hidx, 0, T - 1).reshape(-1), axis=1)
    halo_rows = halo_rows.reshape(B, nT, HALO, d_in)
    halo_rows = halo_rows * hvalid.astype(x.dtype)[None, :, :, None]

    kernel = functools.partial(_ffn_kernel, tile_t=TT)

    out = pl.pallas_call(
        kernel,
        out_shape=jax.ShapeDtypeStruct((B, T_full, d_in), x.dtype),
        grid_spec=pltpu.PrefetchScalarGridSpec(
            num_scalar_prefetch=0,
            grid=(B, nT),
            in_specs=[
                # main activation tile (also provides the residual)
                pl.BlockSpec((1, TT, d_in), lambda b, t: (b, t, 0)),
                # halo rows for this tile
                pl.BlockSpec((1, 1, HALO, d_in), lambda b, t: (b, t, 0, 0)),
                # resident weights / LN params (constant index, single-buffered)
                _resident_spec((K1, d_in, d_hid)),    # w1
                _resident_spec((1, d_hid)),           # b1
                _resident_spec((d_hid, d_in)),        # w2
                _resident_spec((1, d_in)),            # b2
                _resident_spec((1, d_in)),            # gamma
                _resident_spec((1, d_in)),            # beta
            ],
            out_specs=pl.BlockSpec((1, TT, d_in), lambda b, t: (b, t, 0)),
            scratch_shapes=[pltpu.VMEM((TT + 2 * HALO, d_in), mxu_dtype)],
        ),
        compiler_params=pltpu.CompilerParams(
            dimension_semantics=("parallel", "parallel"),
            vmem_limit_bytes=vmem_limit),
    )(x_main, halo_rows, w1, b1, w2, b2, gamma, beta)

    return out if T_full == T else out[:, :T, :]


def init_params(key, d_in, d_hid, dtype=jnp.float32):
    """Deterministic synthetic weights, shaped exactly like the torch module."""
    k1, k2, k3, k4 = jax.random.split(key, 4)
    return {
        "w1": (jax.random.normal(k1, (d_hid, d_in, K1), jnp.float32) * 0.05).astype(dtype),
        "b1": (jax.random.normal(k2, (d_hid,), jnp.float32) * 0.05).astype(dtype),
        "w2": (jax.random.normal(k3, (d_in, d_hid, K2), jnp.float32) * 0.05).astype(dtype),
        "b2": (jax.random.normal(k4, (d_in,), jnp.float32) * 0.05).astype(dtype),
        "gamma": jnp.ones((d_in,), dtype),
        "beta": jnp.zeros((d_in,), dtype),
    }


def _reference(x, params):
    """Pure-JAX reference of the torch forward (eval mode) for sanity checking."""
    pad = (K1 - 1) // 2
    xc = jnp.transpose(x, (0, 2, 1))                       # [B, d_in, T]
    h = jax.lax.conv_general_dilated(
        xc, params["w1"], window_strides=(1,), padding=[(pad, pad)],
        dimension_numbers=("NCH", "OIH", "NCH"))
    h = jax.nn.relu(h + params["b1"][None, :, None])
    y = jax.lax.conv_general_dilated(
        h, params["w2"], window_strides=(1,), padding=[(0, 0)],
        dimension_numbers=("NCH", "OIH", "NCH"))
    y = y + params["b2"][None, :, None]
    y = jnp.transpose(y, (0, 2, 1)) + x                    # residual, [B, T, d_in]
    mean = jnp.mean(y, axis=-1, keepdims=True)
    var = jnp.mean((y - mean) ** 2, axis=-1, keepdims=True)
    return (y - mean) * jax.lax.rsqrt(var + LN_EPS) * params["gamma"] + params["beta"]


if __name__ == "__main__":
    key = jax.random.PRNGKey(0)
    kx, kp, kx2 = jax.random.split(key, 3)

    # Primary small test: whole sequence fits one tile (grid = (B, 1)), exact f32 MXU path.
    B, T, D_IN, D_HID = 2, 16, 32, 64
    x = jax.random.normal(kx, (B, T, D_IN), jnp.float32)
    params = init_params(kp, D_IN, D_HID)

    out = jax.block_until_ready(
        positionwise_feed_forward(x, params, mxu_dtype=jnp.float32))
    ref = _reference(x, params)
    assert out.shape == (B, T, D_IN)
    assert jnp.max(jnp.abs(out - ref)) < 1e-4, "f32 mismatch vs reference"

    # Default production path: f32 in, bf16 MXU feed + f32 accumulate/LN.
    out_d = jax.block_until_ready(positionwise_feed_forward(x, params))
    assert jnp.max(jnp.abs(out_d - ref)) < 5e-2, "bf16-MXU default path mismatch"

    # Time-tiled path (nT > 1, ragged last tile, cross-tile halos), exact f32 check.
    T2 = 200
    x2 = jax.random.normal(kx2, (B, T2, D_IN), jnp.float32)
    out2 = jax.block_until_ready(
        positionwise_feed_forward(x2, params, tile_t=128, mxu_dtype=jnp.float32))
    ref2 = _reference(x2, params)
    assert out2.shape == (B, T2, D_IN)
    assert jnp.max(jnp.abs(out2 - ref2)) < 1e-4, "tiled f32 mismatch vs reference"

    # bf16 weights + activations fed straight to the MXU (f32 accumulate + f32 LN).
    xb = x.astype(jnp.bfloat16)
    pb = {k: v.astype(jnp.bfloat16) for k, v in params.items()}
    outb = jax.block_until_ready(positionwise_feed_forward(xb, pb))
    refb = _reference(xb.astype(jnp.float32),
                      {k: v.astype(jnp.float32) for k, v in pb.items()})
    assert outb.shape == (B, T, D_IN)
    assert jnp.max(jnp.abs(outb.astype(jnp.float32) - refb)) < 5e-2, "bf16 mismatch"

    print("KERNEL_OK")
</pallas_src>

<mosaic_0001>
module attributes {stable_mosaic.version = 11 : i64} {
  func.func @_ffn_kernel(%arg0: i32, %arg1: i32, %arg2: memref<1x16x32xf32, #tpu.memory_space<vmem>>, %arg3: memref<1x1x8x32xf32, #tpu.memory_space<vmem>>, %arg4: memref<9x32x64xf32, #tpu.memory_space<vmem>>, %arg5: memref<1x64xf32, #tpu.memory_space<vmem>>, %arg6: memref<64x32xf32, #tpu.memory_space<vmem>>, %arg7: memref<1x32xf32, #tpu.memory_space<vmem>>, %arg8: memref<1x32xf32, #tpu.memory_space<vmem>>, %arg9: memref<1x32xf32, #tpu.memory_space<vmem>>, %arg10: memref<1x16x32xf32, #tpu.memory_space<vmem>>, %arg11: memref<32x32xf32, #tpu.memory_space<vmem>>) attributes {dimension_semantics = [#tpu.dimension_semantics<parallel>, #tpu.dimension_semantics<parallel>], iteration_bounds = array<i64: 2, 1>, scalar_prefetch = 0 : i64, scratch_operands = 1 : i64, tpu.core_type = #tpu.core_type<tc>, window_params = [{transform_indices = @transform_0, window_bounds = array<i64: 1, 16, 32>}, {transform_indices = @transform_1, window_bounds = array<i64: 1, 1, 8, 32>}, {pipeline_mode = #tpu.pipeline_mode<synchronous>, transform_indices = @transform_2, window_bounds = array<i64: 9, 32, 64>}, {pipeline_mode = #tpu.pipeline_mode<synchronous>, transform_indices = @transform_3, window_bounds = array<i64: 1, 64>}, {pipeline_mode = #tpu.pipeline_mode<synchronous>, transform_indices = @transform_4, window_bounds = array<i64: 64, 32>}, {pipeline_mode = #tpu.pipeline_mode<synchronous>, transform_indices = @transform_5, window_bounds = array<i64: 1, 32>}, {pipeline_mode = #tpu.pipeline_mode<synchronous>, transform_indices = @transform_6, window_bounds = array<i64: 1, 32>}, {pipeline_mode = #tpu.pipeline_mode<synchronous>, transform_indices = @transform_7, window_bounds = array<i64: 1, 32>}, {transform_indices = @transform_8, window_bounds = array<i64: 1, 16, 32>}]} {
    %c0 = arith.constant 0 : index
    %c0_0 = arith.constant 0 : index
    %c0_1 = arith.constant 0 : index
    %c0_2 = arith.constant 0 : index
    %0 = vector.load %arg3[%c0, %c0_0, %c0_1, %c0_2] : memref<1x1x8x32xf32, #tpu.memory_space<vmem>>, vector<1x1x4x32xf32>
    %1 = vector.shape_cast %0 : vector<1x1x4x32xf32> to vector<4x32xf32>
    %c4 = arith.constant 4 : index
    %c0_3 = arith.constant 0 : index
    %2 = vector.load %arg11[%c4, %c0_3] : memref<32x32xf32, #tpu.memory_space<vmem>>, vector<4x32xf32>
    tpu.vector_store %arg11[%c4, %c0_3], %1 {strides = array<i32>} : memref<32x32xf32, #tpu.memory_space<vmem>>, vector<4x32xf32>,
    %c0_4 = arith.constant 0 : index
    %c0_5 = arith.constant 0 : index
    %c0_6 = arith.constant 0 : index
    %3 = vector.load %arg2[%c0_4, %c0_5, %c0_6] : memref<1x16x32xf32, #tpu.memory_space<vmem>>, vector<1x16x32xf32>
    %4 = vector.shape_cast %3 : vector<1x16x32xf32> to vector<16x32xf32>
    %c8 = arith.constant 8 : index
    %c0_7 = arith.constant 0 : index
    %5 = vector.load %arg11[%c8, %c0_7] : memref<32x32xf32, #tpu.memory_space<vmem>>, vector<16x32xf32>
    tpu.vector_store %arg11[%c8, %c0_7], %4 {strides = array<i32>} : memref<32x32xf32, #tpu.memory_space<vmem>>, vector<16x32xf32>,
    %c0_8 = arith.constant 0 : index
    %c0_9 = arith.constant 0 : index
    %c4_10 = arith.constant 4 : index
    %c0_11 = arith.constant 0 : index
    %6 = vector.load %arg3[%c0_8, %c0_9, %c4_10, %c0_11] : memref<1x1x8x32xf32, #tpu.memory_space<vmem>>, vector<1x1x4x32xf32>
    %7 = vector.shape_cast %6 : vector<1x1x4x32xf32> to vector<4x32xf32>
    %c24 = arith.constant 24 : index
    %c0_12 = arith.constant 0 : index
    %8 = vector.load %arg11[%c24, %c0_12] : memref<32x32xf32, #tpu.memory_space<vmem>>, vector<4x32xf32>
    tpu.vector_store %arg11[%c24, %c0_12], %7 {strides = array<i32>} : memref<32x32xf32, #tpu.memory_space<vmem>>, vector<4x32xf32>,
    %c0_13 = arith.constant 0 : index
    %c0_14 = arith.constant 0 : index
    %9 = vector.load %arg11[%c0_13, %c0_14] : memref<32x32xf32, #tpu.memory_space<vmem>>, vector<32x32xf32>
    %c0_15 = arith.constant 0 : index
    %c0_16 = arith.constant 0 : index
    %c0_17 = arith.constant 0 : index
    %10 = vector.load %arg4[%c0_15, %c0_16, %c0_17] : memref<9x32x64xf32, #tpu.memory_space<vmem>>, vector<9x32x64xf32>
    %11 = vector.extract_strided_slice %9 {offsets = [4, 0], sizes = [16, 32], strides = [1, 1]} : vector<32x32xf32> to vector<16x32xf32>
    %12 = vector.extract_strided_slice %10 {offsets = [0, 0, 0], sizes = [1, 32, 64], strides = [1, 1, 1]} : vector<9x32x64xf32> to vector<1x32x64xf32>
    %13 = vector.shape_cast %12 : vector<1x32x64xf32> to vector<32x64xf32>
    %cst = arith.constant dense<0.000000e+00> : vector<16x64xf32>
    %14 = tpu.matmul %11, %13, %cst {dimension_numbers = #tpu.dot_dimension_numbers<[1], [0], [0], [1], [0, 0, 1, 1], [], []>} : vector<16x32xf32>, vector<32x64xf32>, vector<16x64xf32> -> vector<16x64xf32>
    %15 = vector.extract_strided_slice %9 {offsets = [5, 0], sizes = [16, 32], strides = [1, 1]} : vector<32x32xf32> to vector<16x32xf32>
    %16 = vector.extract_strided_slice %10 {offsets = [1, 0, 0], sizes = [1, 32, 64], strides = [1, 1, 1]} : vector<9x32x64xf32> to vector<1x32x64xf32>
    %17 = vector.shape_cast %16 : vector<1x32x64xf32> to vector<32x64xf32>
    %cst_18 = arith.constant dense<0.000000e+00> : vector<16x64xf32>
    %18 = tpu.matmul %15, %17, %cst_18 {dimension_numbers = #tpu.dot_dimension_numbers<[1], [0], [0], [1], [0, 0, 1, 1], [], []>} : vector<16x32xf32>, vector<32x64xf32>, vector<16x64xf32> -> vector<16x64xf32>
    %19 = arith.addf %14, %18 : vector<16x64xf32>
    %20 = vector.extract_strided_slice %9 {offsets = [6, 0], sizes = [16, 32], strides = [1, 1]} : vector<32x32xf32> to vector<16x32xf32>
    %21 = vector.extract_strided_slice %10 {offsets = [2, 0, 0], sizes = [1, 32, 64], strides = [1, 1, 1]} : vector<9x32x64xf32> to vector<1x32x64xf32>
    %22 = vector.shape_cast %21 : vector<1x32x64xf32> to vector<32x64xf32>
    %cst_19 = arith.constant dense<0.000000e+00> : vector<16x64xf32>
    %23 = tpu.matmul %20, %22, %cst_19 {dimension_numbers = #tpu.dot_dimension_numbers<[1], [0], [0], [1], [0, 0, 1, 1], [], []>} : vector<16x32xf32>, vector<32x64xf32>, vector<16x64xf32> -> vector<16x64xf32>
    %24 = arith.addf %19, %23 : vector<16x64xf32>
    %25 = vector.extract_strided_slice %9 {offsets = [7, 0], sizes = [16, 32], strides = [1, 1]} : vector<32x32xf32> to vector<16x32xf32>
    %26 = vector.extract_strided_slice %10 {offsets = [3, 0, 0], sizes = [1, 32, 64], strides = [1, 1, 1]} : vector<9x32x64xf32> to vector<1x32x64xf32>
    %27 = vector.shape_cast %26 : vector<1x32x64xf32> to vector<32x64xf32>
    %cst_20 = arith.constant dense<0.000000e+00> : vector<16x64xf32>
    %28 = tpu.matmul %25, %27, %cst_20 {dimension_numbers = #tpu.dot_dimension_numbers<[1], [0], [0], [1], [0, 0, 1, 1], [], []>} : vector<16x32xf32>, vector<32x64xf32>, vector<16x64xf32> -> vector<16x64xf32>
    %29 = arith.addf %24, %28 : vector<16x64xf32>
    %30 = vector.extract_strided_slice %9 {offsets = [8, 0], sizes = [16, 32], strides = [1, 1]} : vector<32x32xf32> to vector<16x32xf32>
    %31 = vector.extract_strided_slice %10 {offsets = [4, 0, 0], sizes = [1, 32, 64], strides = [1, 1, 1]} : vector<9x32x64xf32> to vector<1x32x64xf32>
    %32 = vector.shape_cast %31 : vector<1x32x64xf32> to vector<32x64xf32>
    %cst_21 = arith.constant dense<0.000000e+00> : vector<16x64xf32>
    %33 = tpu.matmul %30, %32, %cst_21 {dimension_numbers = #tpu.dot_dimension_numbers<[1], [0], [0], [1], [0, 0, 1, 1], [], []>} : vector<16x32xf32>, vector<32x64xf32>, vector<16x64xf32> -> vector<16x64xf32>
    %34 = arith.addf %29, %33 : vector<16x64xf32>
    %35 = vector.extract_strided_slice %9 {offsets = [9, 0], sizes = [16, 32], strides = [1, 1]} : vector<32x32xf32> to vector<16x32xf32>
    %36 = vector.extract_strided_slice %10 {offsets = [5, 0, 0], sizes = [1, 32, 64], strides = [1, 1, 1]} : vector<9x32x64xf32> to vector<1x32x64xf32>
    %37 = vector.shape_cast %36 : vector<1x32x64xf32> to vector<32x64xf32>
    %cst_22 = arith.constant dense<0.000000e+00> : vector<16x64xf32>
    %38 = tpu.matmul %35, %37, %cst_22 {dimension_numbers = #tpu.dot_dimension_numbers<[1], [0], [0], [1], [0, 0, 1, 1], [], []>} : vector<16x32xf32>, vector<32x64xf32>, vector<16x64xf32> -> vector<16x64xf32>
    %39 = arith.addf %34, %38 : vector<16x64xf32>
    %40 = vector.extract_strided_slice %9 {offsets = [10, 0], sizes = [16, 32], strides = [1, 1]} : vector<32x32xf32> to vector<16x32xf32>
    %41 = vector.extract_strided_slice %10 {offsets = [6, 0, 0], sizes = [1, 32, 64], strides = [1, 1, 1]} : vector<9x32x64xf32> to vector<1x32x64xf32>
    %42 = vector.shape_cast %41 : vector<1x32x64xf32> to vector<32x64xf32>
    %cst_23 = arith.constant dense<0.000000e+00> : vector<16x64xf32>
    %43 = tpu.matmul %40, %42, %cst_23 {dimension_numbers = #tpu.dot_dimension_numbers<[1], [0], [0], [1], [0, 0, 1, 1], [], []>} : vector<16x32xf32>, vector<32x64xf32>, vector<16x64xf32> -> vector<16x64xf32>
    %44 = arith.addf %39, %43 : vector<16x64xf32>
    %45 = vector.extract_strided_slice %9 {offsets = [11, 0], sizes = [16, 32], strides = [1, 1]} : vector<32x32xf32> to vector<16x32xf32>
    %46 = vector.extract_strided_slice %10 {offsets = [7, 0, 0], sizes = [1, 32, 64], strides = [1, 1, 1]} : vector<9x32x64xf32> to vector<1x32x64xf32>
    %47 = vector.shape_cast %46 : vector<1x32x64xf32> to vector<32x64xf32>
    %cst_24 = arith.constant dense<0.000000e+00> : vector<16x64xf32>
    %48 = tpu.matmul %45, %47, %cst_24 {dimension_numbers = #tpu.dot_dimension_numbers<[1], [0], [0], [1], [0, 0, 1, 1], [], []>} : vector<16x32xf32>, vector<32x64xf32>, vector<16x64xf32> -> vector<16x64xf32>
    %49 = arith.addf %44, %48 : vector<16x64xf32>
    %50 = vector.extract_strided_slice %9 {offsets = [12, 0], sizes = [16, 32], strides = [1, 1]} : vector<32x32xf32> to vector<16x32xf32>
    %51 = vector.extract_strided_slice %10 {offsets = [8, 0, 0], sizes = [1, 32, 64], strides = [1, 1, 1]} : vector<9x32x64xf32> to vector<1x32x64xf32>
    %52 = vector.shape_cast %51 : vector<1x32x64xf32> to vector<32x64xf32>
    %cst_25 = arith.constant dense<0.000000e+00> : vector<16x64xf32>
    %53 = tpu.matmul %50, %52, %cst_25 {dimension_numbers = #tpu.dot_dimension_numbers<[1], [0], [0], [1], [0, 0, 1, 1], [], []>} : vector<16x32xf32>, vector<32x64xf32>, vector<16x64xf32> -> vector<16x64xf32>
    %54 = arith.addf %49, %53 : vector<16x64xf32>
    %c0_26 = arith.constant 0 : index
    %c0_27 = arith.constant 0 : index
    %55 = vector.load %arg5[%c0_26, %c0_27] : memref<1x64xf32, #tpu.memory_space<vmem>>, vector<1x64xf32>
    %56 = vector.broadcast %55 : vector<1x64xf32> to vector<16x64xf32>
    %57 = arith.addf %54, %56 : vector<16x64xf32>
    %cst_28 = arith.constant 0.000000e+00 : f32
    %58 = vector.broadcast %cst_28 : f32 to vector<16x64xf32>
    %59 = arith.maximumf %57, %58 : vector<16x64xf32>
    %c0_29 = arith.constant 0 : index
    %c0_30 = arith.constant 0 : index
    %60 = vector.load %arg6[%c0_29, %c0_30] : memref<64x32xf32, #tpu.memory_space<vmem>>, vector<64x32xf32>
    %cst_31 = arith.constant dense<0.000000e+00> : vector<16x32xf32>
    %61 = tpu.matmul %59, %60, %cst_31 {dimension_numbers = #tpu.dot_dimension_numbers<[1], [0], [0], [1], [0, 0, 1, 1], [], []>} : vector<16x64xf32>, vector<64x32xf32>, vector<16x32xf32> -> vector<16x32xf32>
    %c0_32 = arith.constant 0 : index
    %c0_33 = arith.constant 0 : index
    %62 = vector.load %arg7[%c0_32, %c0_33] : memref<1x32xf32, #tpu.memory_space<vmem>>, vector<1x32xf32>
    %63 = vector.broadcast %62 : vector<1x32xf32> to vector<16x32xf32>
    %64 = arith.addf %61, %63 : vector<16x32xf32>
    %c0_34 = arith.constant 0 : index
    %c0_35 = arith.constant 0 : index
    %c0_36 = arith.constant 0 : index
    %65 = vector.load %arg2[%c0_34, %c0_35, %c0_36] : memref<1x16x32xf32, #tpu.memory_space<vmem>>, vector<1x16x32xf32>
    %66 = vector.shape_cast %65 : vector<1x16x32xf32> to vector<16x32xf32>
    %67 = arith.addf %64, %66 : vector<16x32xf32>
    %cst_37 = arith.constant dense<0.000000e+00> : vector<16xf32>
    %68 = vector.multi_reduction <add>, %67, %cst_37 [1] : vector<16x32xf32> to vector<16xf32>
    %69 = vector.shape_cast %68 : vector<16xf32> to vector<16x1xf32>
    %cst_38 = arith.constant 3.200000e+01 : f32
    %70 = vector.broadcast %cst_38 : f32 to vector<16x1xf32>
    %71 = arith.divf %69, %70 : vector<16x1xf32>
    %72 = vector.broadcast %71 : vector<16x1xf32> to vector<16x32xf32>
    %73 = arith.subf %67, %72 : vector<16x32xf32>
    %74 = arith.mulf %73, %73 : vector<16x32xf32>
    %cst_39 = arith.constant dense<0.000000e+00> : vector<16xf32>
    %75 = vector.multi_reduction <add>, %74, %cst_39 [1] : vector<16x32xf32> to vector<16xf32>
    %76 = vector.shape_cast %75 : vector<16xf32> to vector<16x1xf32>
    %cst_40 = arith.constant 3.200000e+01 : f32
    %77 = vector.broadcast %cst_40 : f32 to vector<16x1xf32>
    %78 = arith.divf %76, %77 : vector<16x1xf32>
    %cst_41 = arith.constant 9.99999974E-6 : f32
    %79 = vector.broadcast %cst_41 : f32 to vector<16x1xf32>
    %80 = arith.addf %78, %79 : vector<16x1xf32>
    %81 = math.rsqrt %80 : vector<16x1xf32>
    %82 = vector.broadcast %81 : vector<16x1xf32> to vector<16x32xf32>
    %83 = arith.mulf %73, %82 : vector<16x32xf32>
    %c0_42 = arith.constant 0 : index
    %c0_43 = arith.constant 0 : index
    %84 = vector.load %arg8[%c0_42, %c0_43] : memref<1x32xf32, #tpu.memory_space<vmem>>, vector<1x32xf32>
    %85 = vector.broadcast %84 : vector<1x32xf32> to vector<16x32xf32>
    %86 = arith.mulf %83, %85 : vector<16x32xf32>
    %c0_44 = arith.constant 0 : index
    %c0_45 = arith.constant 0 : index
    %87 = vector.load %arg9[%c0_44, %c0_45] : memref<1x32xf32, #tpu.memory_space<vmem>>, vector<1x32xf32>
    %88 = vector.broadcast %87 : vector<1x32xf32> to vector<16x32xf32>
    %89 = arith.addf %86, %88 : vector<16x32xf32>
    %c0_46 = arith.constant 0 : index
    %c0_47 = arith.constant 0 : index
    %c0_48 = arith.constant 0 : index
    %90 = vector.load %arg10[%c0_46, %c0_47, %c0_48] : memref<1x16x32xf32, #tpu.memory_space<vmem>>, vector<1x16x32xf32>
    %91 = vector.shape_cast %90 : vector<1x16x32xf32> to vector<16x32xf32>
    %92 = vector.shape_cast %89 : vector<16x32xf32> to vector<1x16x32xf32>
    tpu.vector_store %arg10[%c0_46, %c0_47, %c0_48], %92 {strides = array<i32>} : memref<1x16x32xf32, #tpu.memory_space<vmem>>, vector<1x16x32xf32>,
    return
  }
  func.func @transform_0(%arg0: i32, %arg1: i32) -> (i32, i32, i32) {
    %c0_i32 = arith.constant 0 : i32
    %c0_i32_0 = arith.constant 0 : i32
    return %arg0, %arg1, %c0_i32 : i32, i32, i32
  }
  func.func @transform_1(%arg0: i32, %arg1: i32) -> (i32, i32, i32, i32) {
    %c0_i32 = arith.constant 0 : i32
    %c0_i32_0 = arith.constant 0 : i32
    %c0_i32_1 = arith.constant 0 : i32
    return %arg0, %arg1, %c0_i32, %c0_i32_0 : i32, i32, i32, i32
  }
  func.func @transform_2(%arg0: i32, %arg1: i32) -> (i32, i32, i32) {
    %c0_i32 = arith.constant 0 : i32
    %c0_i32_0 = arith.constant 0 : i32
    %c0_i32_1 = arith.constant 0 : i32
    %c0_i32_2 = arith.constant 0 : i32
    return %c0_i32, %c0_i32_0, %c0_i32_1 : i32, i32, i32
  }
  func.func @transform_3(%arg0: i32, %arg1: i32) -> (i32, i32) {
    %c0_i32 = arith.constant 0 : i32
    %c0_i32_0 = arith.constant 0 : i32
    %c0_i32_1 = arith.constant 0 : i32
    return %c0_i32, %c0_i32_0 : i32, i32
  }
  func.func @transform_4(%arg0: i32, %arg1: i32) -> (i32, i32) {
    %c0_i32 = arith.constant 0 : i32
    %c0_i32_0 = arith.constant 0 : i32
    %c0_i32_1 = arith.constant 0 : i32
    return %c0_i32, %c0_i32_0 : i32, i32
  }
  func.func @transform_5(%arg0: i32, %arg1: i32) -> (i32, i32) {
    %c0_i32 = arith.constant 0 : i32
    %c0_i32_0 = arith.constant 0 : i32
    %c0_i32_1 = arith.constant 0 : i32
    return %c0_i32, %c0_i32_0 : i32, i32
  }
  func.func @transform_6(%arg0: i32, %arg1: i32) -> (i32, i32) {
    %c0_i32 = arith.constant 0 : i32
    %c0_i32_0 = arith.constant 0 : i32
    %c0_i32_1 = arith.constant 0 : i32
    return %c0_i32, %c0_i32_0 : i32, i32
  }
  func.func @transform_7(%arg0: i32, %arg1: i32) -> (i32, i32) {
    %c0_i32 = arith.constant 0 : i32
    %c0_i32_0 = arith.constant 0 : i32
    %c0_i32_1 = arith.constant 0 : i32
    return %c0_i32, %c0_i32_0 : i32, i32
  }
  func.func @transform_8(%arg0: i32, %arg1: i32) -> (i32, i32, i32) {
    %c0_i32 = arith.constant 0 : i32
    %c0_i32_0 = arith.constant 0 : i32
    return %arg0, %arg1, %c0_i32 : i32, i32, i32
  }
}

</mosaic_0001>

<llo_original>
// kernel: tpu_custom_call.1
$region0: #{tpu_custom_call.1}
  #allocation0 [shape = 'u32[]', space=smem, size = 0x4, offset = 0x4, fixed_abs, tag = 'smem constant byte address 0x4 - core index']
  #allocation1 [shape = 'u32[144,128]{1,0:T(1,128)}', space=vmem, size = 0x12000, scoped, tag = 'internal scratch']
  #allocation2 [shape = 'f32[32,32]{1,0:T(8,128)}', space=vmem, size = 0x4000, scoped, tag = 'scratch operand']
  %s0 = inlined_call_operand.vmem [shape: f32[2,16,32], index: 0, kind: input, shape index: {}]
  %s1 = inlined_call_operand.vmem [shape: f32[2,1,8,32], index: 1, kind: input, shape index: {}]
  %s2 = inlined_call_operand.hbm [shape: f32[9,32,64], index: 2, kind: input, shape index: {}]
  %s3 = inlined_call_operand.vmem [shape: f32[1,64], index: 3, kind: input, shape index: {}]
  %s4 = inlined_call_operand.vmem [shape: f32[64,32], index: 4, kind: input, shape index: {}]
  %s5 = inlined_call_operand.vmem [shape: f32[1,32], index: 5, kind: input, shape index: {}]
  %s6 = inlined_call_operand.vmem [shape: f32[1,32], index: 6, kind: input, shape index: {}]
  %s7 = inlined_call_operand.vmem [shape: f32[1,32], index: 7, kind: input, shape index: {}]
  %s8 = inlined_call_operand.hbm [shape: f32[2,16,32], index: 8, kind: output, shape index: {}]
  %s9 = sld [smem:[#allocation0]]
  $region69: #{tpu_custom_call.1} parent=0
    _
  %s11 = ssub.s32 1, %s9
  %s12 = scalar_select 0, %s11, %s9
  $region1: #{tpu_custom_call.1} parent=0
    #allocation3 [shape = 'u8[147456]{0}', space=vmem, size = 0x24000, scoped, tag = 'input window, operand 2, single buffered']
    #allocation4 [shape = 's32[2]{0}', space=sflag, size = 0x8, scoped, tag = 'scoped memory for tpu_custom_call.1']
    #allocation5 [shape = 's32[2]{0}', space=sflag, size = 0x8, scoped, tag = 'scoped memory for tpu_custom_call.1']
    #allocation6 [shape = 'u8[16384]{0}', space=vmem, size = 0x4000, scoped, tag = 'output window, operand 0']
    %13 = vsyncpa [#allocation4], 0
    %14 = vsyncpa [#allocation5], 0
    %s15 = scalar_lea.sflag [#allocation5], 1
    %16 = vsyncpa %s15, 0
    loop: start=0, step=1, limit=4
    $region2: #{tpu_custom_call.1} parent=1 // loop_pre_header
      _
    $region3: #{tpu_custom_call.1} parent=1 // loop_header
      %s18 = sphi 0, %s22
      %p19 = scmp.ge.s32.totalorder %s18, 4
      %s25 = sphi 0, %s37
      %s26 = sphi 0, %s33
      %s27 = sphi 0, %s25
      %s28 = sphi 0, %s26
      %s29 = sphi 0, %s27
      %s30 = sphi 0, %s28
      %s42 = sphi 0, %s44
      %s45 = sphi 0, %s42
      %s46 = sphi 0, %s45
      %s62 = sphi 0, %s46
      %s70 = sphi 0, %s72
      %s73 = sphi 0, %s70
      %s74 = sphi 0, %s73
      %s90 = sphi 0, %s74
      %s94 = sphi 0, %s94
      %s96 = sphi 0, %s94
      %s97 = sphi 0, %s96
      %s111 = sphi 0, %s97
      %s115 = sphi 0, %s115
      %s117 = sphi 0, %s115
      %s118 = sphi 0, %s117
      %s132 = sphi 0, %s118
      %s136 = sphi 0, %s136
      %s138 = sphi 0, %s136
      %s139 = sphi 0, %s138
      %s153 = sphi 0, %s139
      %s157 = sphi 0, %s157
      %s159 = sphi 0, %s157
      %s160 = sphi 0, %s159
      %s174 = sphi 0, %s160
      %s178 = sphi 0, %s178
      %s180 = sphi 0, %s178
      %s181 = sphi 0, %s180
      %s195 = sphi 0, %s181
      %s199 = sphi 0, %s199
      %s201 = sphi 0, %s199
      %s202 = sphi 0, %s201
      %s216 = sphi 0, %s202
      %s224 = sphi 0, %s226
      %s227 = sphi 0, %s224
      %s228 = sphi 0, %s227
      %s244 = sphi 0, %s228
    $region4: #{tpu_custom_call.1} parent=1 // loop_header_branch
      %21 = sbr.rel (%p19) target = $region8
    $region5: #{tpu_custom_call.1} parent=1 // loop_body
      %s23 = ssub.s32 %s18, 1
      %s24 = ssub.s32 %s18, 2
      %s31 = sadd.s32 1, %s26
      %p32 = scmp.ge.s32.totalorder %s31, 1
      %s33 = scalar_select %p32, 0, %s31
      %s34 = sadd.s32 1, %s25
      %s35 = scalar_select %p32, %s34, %s25
      %p36 = scmp.ge.s32.totalorder %s35, 2
      %s37 = scalar_select %p36, 0, %s35
      %s38 = ssub.s32 %s25, %s37
      %s39 = ssub.s32 %s26, %s33
      %s40 = sor.u32 %s38, %s39
      %p41 = scmp.eq.s32.totalorder %s40, 0
      %s43 = sadd.s32 %s42, 1
      %s44 = scalar_select %p41, %s42, %s43
      %p47 = pneg %p41
      %p48 = scmp.eq.s32.totalorder %s18, 1
      %p49 = por %p47, %p48
      %p50 = scmp.ne.s32.totalorder %s42, %s45
      %p51 = scmp.eq.s32.totalorder %s18, 0
      %p52 = por %p50, %p51
      %p53 = scmp.ne.s32.totalorder %s42, %s45
      %p54 = scmp.eq.s32.totalorder %s23, 1
      %p55 = por %p53, %p54
      %p56 = scmp.ne.s32.totalorder %s45, %s46
      %p57 = scmp.eq.s32.totalorder %s23, 0
      %p58 = por %p56, %p57
      %p59 = scmp.ne.s32.totalorder %s45, %s46
      %p60 = scmp.eq.s32.totalorder %s24, 1
      %p61 = por %p59, %p60
      %p63 = scmp.ne.s32.totalorder %s46, %s62
      %p64 = scmp.eq.s32.totalorder %s24, 0
      %p65 = por %p63, %p64
      %s66 = ssub.s32 %s25, %s37
      %s67 = ssub.s32 %s26, %s33
      %s68 = sor.u32 %s66, %s67
      %p69 = scmp.eq.s32.totalorder %s68, 0
      %s71 = sadd.s32 %s70, 1
      %s72 = scalar_select %p69, %s70, %s71
      %p75 = pneg %p69
      %p76 = scmp.eq.s32.totalorder %s18, 1
      %p77 = por %p75, %p76
      %p78 = scmp.ne.s32.totalorder %s70, %s73
      %p79 = scmp.eq.s32.totalorder %s18, 0
      %p80 = por %p78, %p79
      %p81 = scmp.ne.s32.totalorder %s70, %s73
      %p82 = scmp.eq.s32.totalorder %s23, 1
      %p83 = por %p81, %p82
      %p84 = scmp.ne.s32.totalorder %s73, %s74
      %p85 = scmp.eq.s32.totalorder %s23, 0
      %p86 = por %p84, %p85
      %p87 = scmp.ne.s32.totalorder %s73, %s74
      %p88 = scmp.eq.s32.totalorder %s24, 1
      %p89 = por %p87, %p88
      %p91 = scmp.ne.s32.totalorder %s74, %s90
      %p92 = scmp.eq.s32.totalorder %s24, 0
      %p93 = por %p91, %p92
      %s95 = sadd.s32 %s94, 1
      %p98 = scmp.eq.s32.totalorder %s18, 1
      %p99 = scmp.ne.s32.totalorder %s94, %s96
      %p100 = scmp.eq.s32.totalorder %s18, 0
      %p101 = por %p99, %p100
      %p102 = scmp.ne.s32.totalorder %s94, %s96
      %p103 = scmp.eq.s32.totalorder %s23, 1
      %p104 = por %p102, %p103
      %p105 = scmp.ne.s32.totalorder %s96, %s97
      %p106 = scmp.eq.s32.totalorder %s23, 0
      %p107 = por %p105, %p106
      %p108 = scmp.ne.s32.totalorder %s96, %s97
      %p109 = scmp.eq.s32.totalorder %s24, 1
      %p110 = por %p108, %p109
      %p112 = scmp.ne.s32.totalorder %s97, %s111
      %p113 = scmp.eq.s32.totalorder %s24, 0
      %p114 = por %p112, %p113
      %s116 = sadd.s32 %s115, 1
      %p119 = scmp.eq.s32.totalorder %s18, 1
      %p120 = scmp.ne.s32.totalorder %s115, %s117
      %p121 = scmp.eq.s32.totalorder %s18, 0
      %p122 = por %p120, %p121
      %p123 = scmp.ne.s32.totalorder %s115, %s117
      %p124 = scmp.eq.s32.totalorder %s23, 1
      %p125 = por %p123, %p124
      %p126 = scmp.ne.s32.totalorder %s117, %s118
      %p127 = scmp.eq.s32.totalorder %s23, 0
      %p128 = por %p126, %p127
      %p129 = scmp.ne.s32.totalorder %s117, %s118
      %p130 = scmp.eq.s32.totalorder %s24, 1
      %p131 = por %p129, %p130
      %p133 = scmp.ne.s32.totalorder %s118, %s132
      %p134 = scmp.eq.s32.totalorder %s24, 0
      %p135 = por %p133, %p134
      %s137 = sadd.s32 %s136, 1
      %p140 = scmp.eq.s32.totalorder %s18, 1
      %p141 = scmp.ne.s32.totalorder %s136, %s138
      %p142 = scmp.eq.s32.totalorder %s18, 0
      %p143 = por %p141, %p142
      %p144 = scmp.ne.s32.totalorder %s136, %s138
      %p145 = scmp.eq.s32.totalorder %s23, 1
      %p146 = por %p144, %p145
      %p147 = scmp.ne.s32.totalorder %s138, %s139
      %p148 = scmp.eq.s32.totalorder %s23, 0
      %p149 = por %p147, %p148
      %p150 = scmp.ne.s32.totalorder %s138, %s139
      %p151 = scmp.eq.s32.totalorder %s24, 1
      %p152 = por %p150, %p151
      %p154 = scmp.ne.s32.totalorder %s139, %s153
      %p155 = scmp.eq.s32.totalorder %s24, 0
      %p156 = por %p154, %p155
      %s158 = sadd.s32 %s157, 1
      %p161 = scmp.eq.s32.totalorder %s18, 1
      %p162 = scmp.ne.s32.totalorder %s157, %s159
      %p163 = scmp.eq.s32.totalorder %s18, 0
      %p164 = por %p162, %p163
      %p165 = scmp.ne.s32.totalorder %s157, %s159
      %p166 = scmp.eq.s32.totalorder %s23, 1
      %p167 = por %p165, %p166
      %p168 = scmp.ne.s32.totalorder %s159, %s160
      %p169 = scmp.eq.s32.totalorder %s23, 0
      %p170 = por %p168, %p169
      %p171 = scmp.ne.s32.totalorder %s159, %s160
      %p172 = scmp.eq.s32.totalorder %s24, 1
      %p173 = por %p171, %p172
      %p175 = scmp.ne.s32.totalorder %s160, %s174
      %p176 = scmp.eq.s32.totalorder %s24, 0
      %p177 = por %p175, %p176
      %s179 = sadd.s32 %s178, 1
      %p182 = scmp.eq.s32.totalorder %s18, 1
      %p183 = scmp.ne.s32.totalorder %s178, %s180
      %p184 = scmp.eq.s32.totalorder %s18, 0
      %p185 = por %p183, %p184
      %p186 = scmp.ne.s32.totalorder %s178, %s180
      %p187 = scmp.eq.s32.totalorder %s23, 1
      %p188 = por %p186, %p187
      %p189 = scmp.ne.s32.totalorder %s180, %s181
      %p190 = scmp.eq.s32.totalorder %s23, 0
      %p191 = por %p189, %p190
      %p192 = scmp.ne.s32.totalorder %s180, %s181
      %p193 = scmp.eq.s32.totalorder %s24, 1
      %p194 = por %p192, %p193
      %p196 = scmp.ne.s32.totalorder %s181, %s195
      %p197 = scmp.eq.s32.totalorder %s24, 0
      %p198 = por %p196, %p197
      %s200 = sadd.s32 %s199, 1
      %p203 = scmp.eq.s32.totalorder %s18, 1
      %p204 = scmp.ne.s32.totalorder %s199, %s201
      %p205 = scmp.eq.s32.totalorder %s18, 0
      %p206 = por %p204, %p205
      %p207 = scmp.ne.s32.totalorder %s199, %s201
      %p208 = scmp.eq.s32.totalorder %s23, 1
      %p209 = por %p207, %p208
      %p210 = scmp.ne.s32.totalorder %s201, %s202
      %p211 = scmp.eq.s32.totalorder %s23, 0
      %p212 = por %p210, %p211
      %p213 = scmp.ne.s32.totalorder %s201, %s202
      %p214 = scmp.eq.s32.totalorder %s24, 1
      %p215 = por %p213, %p214
      %p217 = scmp.ne.s32.totalorder %s202, %s216
      %p218 = scmp.eq.s32.totalorder %s24, 0
      %p219 = por %p217, %p218
      %s220 = ssub.s32 %s25, %s37
      %s221 = ssub.s32 %s26, %s33
      %s222 = sor.u32 %s220, %s221
      %p223 = scmp.eq.s32.totalorder %s222, 0
      %s225 = sadd.s32 %s224, 1
      %s226 = scalar_select %p223, %s224, %s225
      %p229 = pneg %p223
      %p230 = scmp.eq.s32.totalorder %s18, 1
      %p231 = por %p229, %p230
      %p232 = scmp.ne.s32.totalorder %s224, %s227
      %p233 = scmp.eq.s32.totalorder %s18, 0
      %p234 = por %p232, %p233
      %p235 = scmp.ne.s32.totalorder %s224, %s227
      %p236 = scmp.eq.s32.totalorder %s23, 1
      %p237 = por %p235, %p236
      %p238 = scmp.ne.s32.totalorder %s227, %s228
      %p239 = scmp.eq.s32.totalorder %s23, 0
      %p240 = por %p238, %p239
      %p241 = scmp.ne.s32.totalorder %s227, %s228
      %p242 = scmp.eq.s32.totalorder %s24, 1
      %p243 = por %p241, %p242
      %p245 = scmp.ne.s32.totalorder %s228, %s244
      %p246 = scmp.eq.s32.totalorder %s24, 0
      %p247 = por %p245, %p246
      %p248 = scmp.le.s32.totalorder 1, %s18
      %p249 = scmp.lt.s32.totalorder %s18, 3
      %p250 = pnand %p248, %p249
      %p251 = pneg %p250
      // Predicated region
      $region9: #{tpu_custom_call.1} parent=5 // pred_check
        _
      $region10: #{tpu_custom_call.1} parent=5 // pred_check_branch
        %253 = sbr.rel (%p250) target = $region12
      $region11: #{tpu_custom_call.1} parent=5 // pred_region
        %s254 = ssub.s32 %s18, 1
        // Predicated region
        $region13: #{tpu_custom_call.1} parent=11 // pred_check
          %p255 = pneg %p107
        $region14: #{tpu_custom_call.1} parent=11 // pred_check_branch
          %257 = sbr.rel (%p255) target = $region16
        $region15: #{tpu_custom_call.1} parent=11 // pred_region
          %s259 = ssub.s32 4608, 4608
          %260 = vsyncadd [#allocation4], %s259
          %s261 = sshll.u32 [#allocation3], 4
          %s262 = int_to_ptr.vmem [resolvable:$true] %s261
          %267 = dma.hbm_to_vmem [thread:$0]  %s2, 4608, %s262, [#allocation4], 128, 128, 8
        $region16: #{tpu_custom_call.1} parent=11 // pred_fallthru
          _
        // Predicated region
        $region17: #{tpu_custom_call.1} parent=11 // pred_check
          %p268 = pneg %p128
        $region18: #{tpu_custom_call.1} parent=11 // pred_check_branch
          %270 = sbr.rel (%p268) target = $region20
        $region19: #{tpu_custom_call.1} parent=11 // pred_region
          _
        $region20: #{tpu_custom_call.1} parent=11 // pred_fallthru
          _
        // Predicated region
        $region21: #{tpu_custom_call.1} parent=11 // pred_check
          %p271 = pneg %p149
        $region22: #{tpu_custom_call.1} parent=11 // pred_check_branch
          %273 = sbr.rel (%p271) target = $region24
        $region23: #{tpu_custom_call.1} parent=11 // pred_region
          _
        $region24: #{tpu_custom_call.1} parent=11 // pred_fallthru
          _
        // Predicated region
        $region25: #{tpu_custom_call.1} parent=11 // pred_check
          %p274 = pneg %p170
        $region26: #{tpu_custom_call.1} parent=11 // pred_check_branch
          %276 = sbr.rel (%p274) target = $region28
        $region27: #{tpu_custom_call.1} parent=11 // pred_region
          _
        $region28: #{tpu_custom_call.1} parent=11 // pred_fallthru
          _
        // Predicated region
        $region29: #{tpu_custom_call.1} parent=11 // pred_check
          %p277 = pneg %p191
        $region30: #{tpu_custom_call.1} parent=11 // pred_check_branch
          %279 = sbr.rel (%p277) target = $region32
        $region31: #{tpu_custom_call.1} parent=11 // pred_region
          _
        $region32: #{tpu_custom_call.1} parent=11 // pred_fallthru
          _
        // Predicated region
        $region33: #{tpu_custom_call.1} parent=11 // pred_check
          %p280 = pneg %p212
        $region34: #{tpu_custom_call.1} parent=11 // pred_check_branch
          %282 = sbr.rel (%p280) target = $region36
        $region35: #{tpu_custom_call.1} parent=11 // pred_region
          _
        $region36: #{tpu_custom_call.1} parent=11 // pred_fallthru
          _
      $region12: #{tpu_custom_call.1} parent=5 // pred_fallthru
        _
      %p283 = scmp.lt.s32.totalorder %s18, 2
      // Predicated region
      $region37: #{tpu_custom_call.1} parent=5 // pred_check
        %p284 = pneg %p283
      $region38: #{tpu_custom_call.1} parent=5 // pred_check_branch
        %286 = sbr.rel (%p284) target = $region40
      $region39: #{tpu_custom_call.1} parent=5 // pred_region
        // Predicated region
        $region41: #{tpu_custom_call.1} parent=39 // pred_check
          %p287 = pneg %p52
        $region42: #{tpu_custom_call.1} parent=39 // pred_check_branch
          %289 = sbr.rel (%p287) target = $region44
        $region43: #{tpu_custom_call.1} parent=39 // pred_region
          %s290 = smul.u32 2, %s26
          %p291 = scmp.lt.s32.totalorder %s25, 1
          %s292 = scalar_select %p291, %s25, 1
          %p293 = scmp.lt.s32.totalorder %s290, 1
          %s294 = scalar_select %p293, %s290, 1
          %s295 = smul.addr %s292, 2
          %s296 = sadd.s32 %s294, %s295
          %s297 = smul.addr %s296, 8
          %s298 = scalar_lea.vmem %s0, %s297
          %s299 = smul.u32 2, %s26
        $region44: #{tpu_custom_call.1} parent=39 // pred_fallthru
          _
        // Predicated region
        $region45: #{tpu_custom_call.1} parent=39 // pred_check
          %p300 = pneg %p80
        $region46: #{tpu_custom_call.1} parent=39 // pred_check_branch
          %302 = sbr.rel (%p300) target = $region48
        $region47: #{tpu_custom_call.1} parent=39 // pred_region
          %p303 = scmp.lt.s32.totalorder %s25, 1
          %s304 = scalar_select %p303, %s25, 1
          %p305 = scmp.lt.s32.totalorder %s26, 0
          %s306 = scalar_select %p305, %s26, 0
          %s307 = sadd.s32 %s306, %s304
          %s308 = smul.addr %s307, 8
          %s309 = scalar_lea.vmem %s1, %s308
        $region48: #{tpu_custom_call.1} parent=39 // pred_fallthru
          _
      $region40: #{tpu_custom_call.1} parent=5 // pred_fallthru
        _
      %p310 = scmp.le.s32.totalorder 1, %s18
      %p311 = scmp.lt.s32.totalorder %s18, 3
      %p312 = pnand %p310, %p311
      %p313 = pneg %p312
      // Predicated region
      $region49: #{tpu_custom_call.1} parent=5 // pred_check
        _
      $region50: #{tpu_custom_call.1} parent=5 // pred_check_branch
        %315 = sbr.rel (%p312) target = $region52
      $region51: #{tpu_custom_call.1} parent=5 // pred_region
        %s316 = ssub.s32 %s18, 1
        // Predicated region
        $region53: #{tpu_custom_call.1} parent=51 // pred_check
          %p317 = pneg %p107
        $region54: #{tpu_custom_call.1} parent=51 // pred_check_branch
          %319 = sbr.rel (%p317) target = $region56
        $region55: #{tpu_custom_call.1} parent=51 // pred_region
          %320 = dma.done [#allocation4], 4608
        $region56: #{tpu_custom_call.1} parent=51 // pred_fallthru
          _
        %s321 = smul.u32 2, %s28
        %p322 = scmp.lt.s32.totalorder %s27, 1
        %s323 = scalar_select %p322, %s27, 1
        %p324 = scmp.lt.s32.totalorder %s321, 1
        %s325 = scalar_select %p324, %s321, 1
        %s326 = smul.addr %s323, 2
        %s327 = sadd.s32 %s325, %s326
        %s328 = smul.addr %s327, 8
        %s329 = scalar_lea.vmem %s0, %s328
        %p330 = pneg %p58
        %p331 = pneg %p55
        %p332 = scmp.lt.s32.totalorder %s27, 1
        %s333 = scalar_select %p332, %s27, 1
        %p334 = scmp.lt.s32.totalorder %s28, 0
        %s335 = scalar_select %p334, %s28, 0
        %s336 = sadd.s32 %s335, %s333
        %s337 = smul.addr %s336, 8
        %s338 = scalar_lea.vmem %s1, %s337
        %p339 = pneg %p86
        %p340 = pneg %p83
        %p341 = pneg %p107
        %p342 = pneg %p104
        %p343 = pneg %p128
        %p344 = pneg %p125
        %p345 = pneg %p149
        %p346 = pneg %p146
        %p347 = pneg %p170
        %p348 = pneg %p167
        %p349 = pneg %p191
        %p350 = pneg %p188
        %p351 = pneg %p212
        %p352 = pneg %p209
        %p353 = pneg %p240
        %p354 = pneg %p237
        %s355 = sand.u32 %s227, 1
        %s356 = scalar_lea.sflag [#allocation5], %s355
        %s357 = sand.u32 %s227, 1
        %s358 = smul.addr %s357, 16
        %s359 = scalar_lea.vmem [#allocation6], %s358
        %s360 = smul.u32 2, %s28
        %p361 = scmp.lt.s32.totalorder %s27, 1
        %s362 = scalar_select %p361, %s27, 1
        %p363 = scmp.lt.s32.totalorder %s360, 1
        %s364 = scalar_select %p363, %s360, 1
        %s365 = smul.addr %s362, 2
        %s366 = sadd.s32 %s364, %s365
        %s367 = smul.addr %s366, 8
        %s368 = scalar_lea.vmem %s0, %s367
        %s369 = smul.u32 2, %s28
        %p370 = scmp.lt.s32.totalorder %s27, 1
        %s371 = scalar_select %p370, %s27, 1
        %p372 = scmp.lt.s32.totalorder %s28, 0
        %s373 = scalar_select %p372, %s28, 0
        %s374 = sadd.s32 %s373, %s371
        %s375 = smul.addr %s374, 8
        %s376 = scalar_lea.vmem %s1, %s375
        %s377 = smul.u32 2, %s28
        %v378 = vld [vmem:[%s376] sm:$0xf]
        %vm379 = vcmask 257024
        %380 = vst.msk [vmem:[#allocation2 + $0x4] sm:$0xf] %vm379, %v378
        %v381 = vld [vmem:[%s368] sm:$0xff]
        %v382 = vld [vmem:[%s368 + $0x8] sm:$0xff]
        %vm383 = vcmask 261120
        %384 = vst.msk [vmem:[#allocation2 + $0x8] sm:$0xff] %vm383, %v381
        %385 = vst.msk [vmem:[#allocation2 + $0x10] sm:$0xff] %vm383, %v382
        %v386 = vld [vmem:[%s376 + $0x4] sm:$0xf]
        %387 = vst.msk [vmem:[#allocation2 + $0x18] sm:$0xf] %vm379, %v386
        %v388 = vld [vmem:[#allocation2] sm:$0xff]
        %v389 = vld [vmem:[#allocation2 + $0x8] sm:$0xff]
        %v390 = vld [vmem:[#allocation2 + $0x10] sm:$0xff]
        %v391 = vld [vmem:[#allocation2 + $0x18] sm:$0xff]
        %v392 = vld [vmem:[#allocation3] sm:$0xff]
        %v393 = vld [vmem:[#allocation3 + $0x8] sm:$0xff]
        %v394 = vld [vmem:[#allocation3 + $0x10] sm:$0xff]
        %v395 = vld [vmem:[#allocation3 + $0x18] sm:$0xff]
        %v396 = vld [vmem:[#allocation3 + $0x20] sm:$0xff]
        %v397 = vld [vmem:[#allocation3 + $0x28] sm:$0xff]
        %v398 = vld [vmem:[#allocation3 + $0x30] sm:$0xff]
        %v399 = vld [vmem:[#allocation3 + $0x38] sm:$0xff]
        %v400 = vld [vmem:[#allocation3 + $0x40] sm:$0xff]
        %v401 = vld [vmem:[#allocation3 + $0x48] sm:$0xff]
        %v402 = vld [vmem:[#allocation3 + $0x50] sm:$0xff]
        %v403 = vld [vmem:[#allocation3 + $0x58] sm:$0xff]
        %v404 = vld [vmem:[#allocation3 + $0x60] sm:$0xff]
        %v405 = vld [vmem:[#allocation3 + $0x68] sm:$0xff]
        %v406 = vld [vmem:[#allocation3 + $0x70] sm:$0xff]
        %v407 = vld [vmem:[#allocation3 + $0x78] sm:$0xff]
        %v408 = vld [vmem:[#allocation3 + $0x80] sm:$0xff]
        %v409 = vld [vmem:[#allocation3 + $0x88] sm:$0xff]
        %v410 = vld [vmem:[#allocation3 + $0x90] sm:$0xff]
        %v411 = vld [vmem:[#allocation3 + $0x98] sm:$0xff]
        %v412 = vld [vmem:[#allocation3 + $0xa0] sm:$0xff]
        %v413 = vld [vmem:[#allocation3 + $0xa8] sm:$0xff]
        %v414 = vld [vmem:[#allocation3 + $0xb0] sm:$0xff]
        %v415 = vld [vmem:[#allocation3 + $0xb8] sm:$0xff]
        %v416 = vld [vmem:[#allocation3 + $0xc0] sm:$0xff]
        %v417 = vld [vmem:[#allocation3 + $0xc8] sm:$0xff]
        %v418 = vld [vmem:[#allocation3 + $0xd0] sm:$0xff]
        %v419 = vld [vmem:[#allocation3 + $0xd8] sm:$0xff]
        %v420 = vld [vmem:[#allocation3 + $0xe0] sm:$0xff]
        %v421 = vld [vmem:[#allocation3 + $0xe8] sm:$0xff]
        %v422 = vld [vmem:[#allocation3 + $0xf0] sm:$0xff]
        %v423 = vld [vmem:[#allocation3 + $0xf8] sm:$0xff]
        %v424 = vld [vmem:[#allocation3 + $0x100] sm:$0xff]
        %v425 = vld [vmem:[#allocation3 + $0x108] sm:$0xff]
        %v426 = vld [vmem:[#allocation3 + $0x110] sm:$0xff]
        %v427 = vld [vmem:[#allocation3 + $0x118] sm:$0xff]
        %vm431 = vcmask 1042432
        %v432 = vrot.slane %v388, 5
        %v433 = vrot.slane %v389, 5
        %v434 = vsel %vm431, %v432, %v433
        %v435 = vrot.slane %v390, 5
        %v436 = vsel %vm431, %v433, %v435
        %v437 = vsel %vm383, %v434, 0
        %v439 = vsel %vm383, %v436, 0
        %441 = vmatprep.subr.mxu0 0.0
        %442 = vmatpush1.msra.mxu0 %v396
        %443 = vmatprep.subr.mxu0 0.0
        %444 = vmatpush1.msra.mxu0 %v397
        %445 = vmatprep.subr.mxu0 0.0
        %446 = vmatpush1.msra.mxu0 %v398
        %447 = vmatprep.subr.mxu0 0.0
        %448 = vmatpush1.msra.mxu0 %v399
        %449 = vmatprep.subr.mxu0 0.0
        %450 = vmatpush1.msra.mxu0 0.0
        %451 = vmatprep.subr.mxu0 0.0
        %452 = vmatpush1.msra.mxu0 0.0
        %453 = vmatprep.subr.mxu0 0.0
        %454 = vmatpush1.msra.mxu0 0.0
        %455 = vmatprep.subr.mxu0 0.0
        %456 = vmatpush1.msra.mxu0 0.0
        %457 = vmatprep.subr.mxu0 0.0
        %458 = vmatpush1.msra.mxu0 0.0
        %459 = vmatprep.subr.mxu0 0.0
        %460 = vmatpush1.msra.mxu0 0.0
        %461 = vmatprep.subr.mxu0 0.0
        %462 = vmatpush1.msra.mxu0 0.0
        %463 = vmatprep.subr.mxu0 0.0
        %464 = vmatpush1.msra.mxu0 0.0
        %465 = vmatprep.subr.mxu0 0.0
        %466 = vmatpush1.msra.mxu0 0.0
        %467 = vmatprep.subr.mxu0 0.0
        %468 = vmatpush1.msra.mxu0 0.0
        %469 = vmatprep.subr.mxu0 0.0
        %470 = vmatpush1.msra.mxu0 0.0
        %471 = vmatprep.subr.mxu0 0.0
        %472 = vmatpush1.msra.mxu0 0.0
        %473 = vmatprep.subr.mxu0 0.0
        %474 = vmatpush1.msra.mxu0 0.0
        %475 = vmatprep.subr.mxu0 0.0
        %476 = vmatpush1.msra.mxu0 0.0
        %477 = vmatprep.subr.mxu0 0.0
        %478 = vmatpush1.msra.mxu0 0.0
        %479 = vmatprep.subr.mxu0 0.0
        %480 = vmatpush1.msra.mxu0 0.0
        %481 = vmatprep.subr.mxu0 0.0
        %482 = vmatpush1.msra.mxu0 0.0
        %483 = vmatprep.subr.mxu0 0.0
        %484 = vmatpush1.msra.mxu0 0.0
        %485 = vmatprep.subr.mxu0 0.0
        %486 = vmatpush1.msra.mxu0 0.0
        %487 = vmatprep.subr.mxu0 0.0
        %488 = vmatpush1.msra.mxu0 0.0
        %489 = vmatprep.subr.mxu0 0.0
        %490 = vmatpush1.msra.mxu0 0.0
        %491 = vmatprep.subr.mxu0 0.0
        %492 = vmatpush1.msra.mxu0 0.0
        %493 = vmatprep.subr.mxu0 0.0
        %494 = vmatpush1.msra.mxu0 0.0
        %495 = vmatprep.subr.mxu0 0.0
        %496 = vmatpush1.msra.mxu0 0.0
        %497 = vmatprep.subr.mxu0 0.0
        %498 = vmatpush1.msra.mxu0 0.0
        %499 = vmatprep.subr.mxu0 0.0
        %500 = vmatpush1.msra.mxu0 0.0
        %501 = vmatprep.subr.mxu0 0.0
        %502 = vmatpush1.msra.mxu0 0.0
        %503 = vmatprep.subr.mxu0 0.0
        %504 = vmatpush1.msra.mxu0 0.0
        %505 = vmatprep.mubr.f32.mxu0 0.0
        %506 = vmatmul.mubr.f32.gmra.mrb[0].mxu0 %v437
        %v507 = vpop.f32.mrb[0].mxu0
        %v508 = vadd.f32 0.0, %v507
        %v509 = vpop.f32.mrb[0].mxu0
        %510 = vmatprep.mubr.f32.mxu0 0.0
        %511 = vmatmul.mubr.f32.gmra.mrb[0].mxu0 %v439
        %v512 = vpop.f32.mrb[0].mxu0
        %v513 = vadd.f32 0.0, %v512
        %v514 = vpop.f32.mrb[0].mxu0
        %515 = vdwg.mxu0
        %vm516 = vcmask 1043456
        %v517 = vrot.slane %v388, 4
        %v518 = vrot.slane %v389, 4
        %v519 = vsel %vm516, %v517, %v518
        %v520 = vrot.slane %v390, 4
        %v521 = vsel %vm516, %v518, %v520
        %v522 = vsel %vm383, %v519, 0
        %v524 = vsel %vm383, %v521, 0
        %526 = vmatprep.subr.mxu0 0.0
        %527 = vmatpush1.msra.mxu0 %v392
        %528 = vmatprep.subr.mxu0 0.0
        %529 = vmatpush1.msra.mxu0 %v393
        %530 = vmatprep.subr.mxu0 0.0
        %531 = vmatpush1.msra.mxu0 %v394
        %532 = vmatprep.subr.mxu0 0.0
        %533 = vmatpush1.msra.mxu0 %v395
        %534 = vmatprep.subr.mxu0 0.0
        %535 = vmatpush1.msra.mxu0 0.0
        %536 = vmatprep.subr.mxu0 0.0
        %537 = vmatpush1.msra.mxu0 0.0
        %538 = vmatprep.subr.mxu0 0.0
        %539 = vmatpush1.msra.mxu0 0.0
        %540 = vmatprep.subr.mxu0 0.0
        %541 = vmatpush1.msra.mxu0 0.0
        %542 = vmatprep.subr.mxu0 0.0
        %543 = vmatpush1.msra.mxu0 0.0
        %544 = vmatprep.subr.mxu0 0.0
        %545 = vmatpush1.msra.mxu0 0.0
        %546 = vmatprep.subr.mxu0 0.0
        %547 = vmatpush1.msra.mxu0 0.0
        %548 = vmatprep.subr.mxu0 0.0
        %549 = vmatpush1.msra.mxu0 0.0
        %550 = vmatprep.subr.mxu0 0.0
        %551 = vmatpush1.msra.mxu0 0.0
        %552 = vmatprep.subr.mxu0 0.0
        %553 = vmatpush1.msra.mxu0 0.0
        %554 = vmatprep.subr.mxu0 0.0
        %555 = vmatpush1.msra.mxu0 0.0
        %556 = vmatprep.subr.mxu0 0.0
        %557 = vmatpush1.msra.mxu0 0.0
        %558 = vmatprep.subr.mxu0 0.0
        %559 = vmatpush1.msra.mxu0 0.0
        %560 = vmatprep.subr.mxu0 0.0
        %561 = vmatpush1.msra.mxu0 0.0
        %562 = vmatprep.subr.mxu0 0.0
        %563 = vmatpush1.msra.mxu0 0.0
        %564 = vmatprep.subr.mxu0 0.0
        %565 = vmatpush1.msra.mxu0 0.0
        %566 = vmatprep.subr.mxu0 0.0
        %567 = vmatpush1.msra.mxu0 0.0
        %568 = vmatprep.subr.mxu0 0.0
        %569 = vmatpush1.msra.mxu0 0.0
        %570 = vmatprep.subr.mxu0 0.0
        %571 = vmatpush1.msra.mxu0 0.0
        %572 = vmatprep.subr.mxu0 0.0
        %573 = vmatpush1.msra.mxu0 0.0
        %574 = vmatprep.subr.mxu0 0.0
        %575 = vmatpush1.msra.mxu0 0.0
        %576 = vmatprep.subr.mxu0 0.0
        %577 = vmatpush1.msra.mxu0 0.0
        %578 = vmatprep.subr.mxu0 0.0
        %579 = vmatpush1.msra.mxu0 0.0
        %580 = vmatprep.subr.mxu0 0.0
        %581 = vmatpush1.msra.mxu0 0.0
        %582 = vmatprep.subr.mxu0 0.0
        %583 = vmatpush1.msra.mxu0 0.0
        %584 = vmatprep.subr.mxu0 0.0
        %585 = vmatpush1.msra.mxu0 0.0
        %586 = vmatprep.subr.mxu0 0.0
        %587 = vmatpush1.msra.mxu0 0.0
        %588 = vmatprep.subr.mxu0 0.0
        %589 = vmatpush1.msra.mxu0 0.0
        %590 = vmatprep.mubr.f32.mxu0 0.0
        %591 = vmatmul.mubr.f32.gmra.mrb[0].mxu0 %v522
        %v592 = vpop.f32.mrb[0].mxu0
        %v593 = vadd.f32 %v508, %v592
        %v594 = vpop.f32.mrb[0].mxu0
        %595 = vmatprep.mubr.f32.mxu0 0.0
        %596 = vmatmul.mubr.f32.gmra.mrb[0].mxu0 %v524
        %v597 = vpop.f32.mrb[0].mxu0
        %v598 = vadd.f32 %v513, %v597
        %v599 = vpop.f32.mrb[0].mxu0
        %600 = vdwg.mxu0
        %vm601 = vcmask 1041408
        %v602 = vrot.slane %v388, 6
        %v603 = vrot.slane %v389, 6
        %v604 = vsel %vm601, %v602, %v603
        %v605 = vrot.slane %v390, 6
        %v606 = vsel %vm601, %v603, %v605
        %v607 = vsel %vm383, %v604, 0
        %v609 = vsel %vm383, %v606, 0
        %611 = vmatprep.subr.mxu0 0.0
        %612 = vmatpush1.msra.mxu0 %v400
        %613 = vmatprep.subr.mxu0 0.0
        %614 = vmatpush1.msra.mxu0 %v401
        %615 = vmatprep.subr.mxu0 0.0
        %616 = vmatpush1.msra.mxu0 %v402
        %617 = vmatprep.subr.mxu0 0.0
        %618 = vmatpush1.msra.mxu0 %v403
        %619 = vmatprep.subr.mxu0 0.0
        %620 = vmatpush1.msra.mxu0 0.0
        %621 = vmatprep.subr.mxu0 0.0
        %622 = vmatpush1.msra.mxu0 0.0
        %623 = vmatprep.subr.mxu0 0.0
        %624 = vmatpush1.msra.mxu0 0.0
        %625 = vmatprep.subr.mxu0 0.0
        %626 = vmatpush1.msra.mxu0 0.0
        %627 = vmatprep.subr.mxu0 0.0
        %628 = vmatpush1.msra.mxu0 0.0
        %629 = vmatprep.subr.mxu0 0.0
        %630 = vmatpush1.msra.mxu0 0.0
        %631 = vmatprep.subr.mxu0 0.0
        %632 = vmatpush1.msra.mxu0 0.0
        %633 = vmatprep.subr.mxu0 0.0
        %634 = vmatpush1.msra.mxu0 0.0
        %635 = vmatprep.subr.mxu0 0.0
        %636 = vmatpush1.msra.mxu0 0.0
        %637 = vmatprep.subr.mxu0 0.0
        %638 = vmatpush1.msra.mxu0 0.0
        %639 = vmatprep.subr.mxu0 0.0
        %640 = vmatpush1.msra.mxu0 0.0
        %641 = vmatprep.subr.mxu0 0.0
        %642 = vmatpush1.msra.mxu0 0.0
        %643 = vmatprep.subr.mxu0 0.0
        %644 = vmatpush1.msra.mxu0 0.0
        %645 = vmatprep.subr.mxu0 0.0
        %646 = vmatpush1.msra.mxu0 0.0
        %647 = vmatprep.subr.mxu0 0.0
        %648 = vmatpush1.msra.mxu0 0.0
        %649 = vmatprep.subr.mxu0 0.0
        %650 = vmatpush1.msra.mxu0 0.0
        %651 = vmatprep.subr.mxu0 0.0
        %652 = vmatpush1.msra.mxu0 0.0
        %653 = vmatprep.subr.mxu0 0.0
        %654 = vmatpush1.msra.mxu0 0.0
        %655 = vmatprep.subr.mxu0 0.0
        %656 = vmatpush1.msra.mxu0 0.0
        %657 = vmatprep.subr.mxu0 0.0
        %658 = vmatpush1.msra.mxu0 0.0
        %659 = vmatprep.subr.mxu0 0.0
        %660 = vmatpush1.msra.mxu0 0.0
        %661 = vmatprep.subr.mxu0 0.0
        %662 = vmatpush1.msra.mxu0 0.0
        %663 = vmatprep.subr.mxu0 0.0
        %664 = vmatpush1.msra.mxu0 0.0
        %665 = vmatprep.subr.mxu0 0.0
        %666 = vmatpush1.msra.mxu0 0.0
        %667 = vmatprep.subr.mxu0 0.0
        %668 = vmatpush1.msra.mxu0 0.0
        %669 = vmatprep.subr.mxu0 0.0
        %670 = vmatpush1.msra.mxu0 0.0
        %671 = vmatprep.subr.mxu0 0.0
        %672 = vmatpush1.msra.mxu0 0.0
        %673 = vmatprep.subr.mxu0 0.0
        %674 = vmatpush1.msra.mxu0 0.0
        %675 = vmatprep.mubr.f32.mxu0 0.0
        %676 = vmatmul.mubr.f32.gmra.mrb[0].mxu0 %v607
        %v677 = vpop.f32.mrb[0].mxu0
        %v678 = vadd.f32 0.0, %v677
        %v679 = vpop.f32.mrb[0].mxu0
        %680 = vmatprep.mubr.f32.mxu0 0.0
        %681 = vmatmul.mubr.f32.gmra.mrb[0].mxu0 %v609
        %v682 = vpop.f32.mrb[0].mxu0
        %v683 = vadd.f32 0.0, %v682
        %v684 = vpop.f32.mrb[0].mxu0
        %685 = vdwg.mxu0
        %v686 = vadd.f32 %v593, %v678
        %v687 = vadd.f32 %v598, %v683
        %vm688 = vcmask 1040384
        %v689 = vrot.slane %v388, 7
        %v690 = vrot.slane %v389, 7
        %v691 = vsel %vm688, %v689, %v690
        %v692 = vrot.slane %v390, 7
        %v693 = vsel %vm688, %v690, %v692
        %v694 = vsel %vm383, %v691, 0
        %v696 = vsel %vm383, %v693, 0
        %698 = vmatprep.subr.mxu0 0.0
        %699 = vmatpush1.msra.mxu0 %v404
        %700 = vmatprep.subr.mxu0 0.0
        %701 = vmatpush1.msra.mxu0 %v405
        %702 = vmatprep.subr.mxu0 0.0
        %703 = vmatpush1.msra.mxu0 %v406
        %704 = vmatprep.subr.mxu0 0.0
        %705 = vmatpush1.msra.mxu0 %v407
        %706 = vmatprep.subr.mxu0 0.0
        %707 = vmatpush1.msra.mxu0 0.0
        %708 = vmatprep.subr.mxu0 0.0
        %709 = vmatpush1.msra.mxu0 0.0
        %710 = vmatprep.subr.mxu0 0.0
        %711 = vmatpush1.msra.mxu0 0.0
        %712 = vmatprep.subr.mxu0 0.0
        %713 = vmatpush1.msra.mxu0 0.0
        %714 = vmatprep.subr.mxu0 0.0
        %715 = vmatpush1.msra.mxu0 0.0
        %716 = vmatprep.subr.mxu0 0.0
        %717 = vmatpush1.msra.mxu0 0.0
        %718 = vmatprep.subr.mxu0 0.0
        %719 = vmatpush1.msra.mxu0 0.0
        %720 = vmatprep.subr.mxu0 0.0
        %721 = vmatpush1.msra.mxu0 0.0
        %722 = vmatprep.subr.mxu0 0.0
        %723 = vmatpush1.msra.mxu0 0.0
        %724 = vmatprep.subr.mxu0 0.0
        %725 = vmatpush1.msra.mxu0 0.0
        %726 = vmatprep.subr.mxu0 0.0
        %727 = vmatpush1.msra.mxu0 0.0
        %728 = vmatprep.subr.mxu0 0.0
        %729 = vmatpush1.msra.mxu0 0.0
        %730 = vmatprep.subr.mxu0 0.0
        %731 = vmatpush1.msra.mxu0 0.0
        %732 = vmatprep.subr.mxu0 0.0
        %733 = vmatpush1.msra.mxu0 0.0
        %734 = vmatprep.subr.mxu0 0.0
        %735 = vmatpush1.msra.mxu0 0.0
        %736 = vmatprep.subr.mxu0 0.0
        %737 = vmatpush1.msra.mxu0 0.0
        %738 = vmatprep.subr.mxu0 0.0
        %739 = vmatpush1.msra.mxu0 0.0
        %740 = vmatprep.subr.mxu0 0.0
        %741 = vmatpush1.msra.mxu0 0.0
        %742 = vmatprep.subr.mxu0 0.0
        %743 = vmatpush1.msra.mxu0 0.0
        %744 = vmatprep.subr.mxu0 0.0
        %745 = vmatpush1.msra.mxu0 0.0
        %746 = vmatprep.subr.mxu0 0.0
        %747 = vmatpush1.msra.mxu0 0.0
        %748 = vmatprep.subr.mxu0 0.0
        %749 = vmatpush1.msra.mxu0 0.0
        %750 = vmatprep.subr.mxu0 0.0
        %751 = vmatpush1.msra.mxu0 0.0
        %752 = vmatprep.subr.mxu0 0.0
        %753 = vmatpush1.msra.mxu0 0.0
        %754 = vmatprep.subr.mxu0 0.0
        %755 = vmatpush1.msra.mxu0 0.0
        %756 = vmatprep.subr.mxu0 0.0
        %757 = vmatpush1.msra.mxu0 0.0
        %758 = vmatprep.subr.mxu0 0.0
        %759 = vmatpush1.msra.mxu0 0.0
        %760 = vmatprep.subr.mxu0 0.0
        %761 = vmatpush1.msra.mxu0 0.0
        %762 = vmatprep.mubr.f32.mxu0 0.0
        %763 = vmatmul.mubr.f32.gmra.mrb[0].mxu0 %v694
        %v764 = vpop.f32.mrb[0].mxu0
        %v765 = vadd.f32 0.0, %v764
        %v766 = vpop.f32.mrb[0].mxu0
        %767 = vmatprep.mubr.f32.mxu0 0.0
        %768 = vmatmul.mubr.f32.gmra.mrb[0].mxu0 %v696
        %v769 = vpop.f32.mrb[0].mxu0
        %v770 = vadd.f32 0.0, %v769
        %v771 = vpop.f32.mrb[0].mxu0
        %772 = vdwg.mxu0
        %v773 = vadd.f32 %v686, %v765
        %v774 = vadd.f32 %v687, %v770
        %v775 = vsel %vm383, %v389, 0
        %v777 = vsel %vm383, %v390, 0
        %779 = vmatprep.subr.mxu0 0.0
        %780 = vmatpush1.msra.mxu0 %v408
        %781 = vmatprep.subr.mxu0 0.0
        %782 = vmatpush1.msra.mxu0 %v409
        %783 = vmatprep.subr.mxu0 0.0
        %784 = vmatpush1.msra.mxu0 %v410
        %785 = vmatprep.subr.mxu0 0.0
        %786 = vmatpush1.msra.mxu0 %v411
        %787 = vmatprep.subr.mxu0 0.0
        %788 = vmatpush1.msra.mxu0 0.0
        %789 = vmatprep.subr.mxu0 0.0
        %790 = vmatpush1.msra.mxu0 0.0
        %791 = vmatprep.subr.mxu0 0.0
        %792 = vmatpush1.msra.mxu0 0.0
        %793 = vmatprep.subr.mxu0 0.0
        %794 = vmatpush1.msra.mxu0 0.0
        %795 = vmatprep.subr.mxu0 0.0
        %796 = vmatpush1.msra.mxu0 0.0
        %797 = vmatprep.subr.mxu0 0.0
        %798 = vmatpush1.msra.mxu0 0.0
        %799 = vmatprep.subr.mxu0 0.0
        %800 = vmatpush1.msra.mxu0 0.0
        %801 = vmatprep.subr.mxu0 0.0
        %802 = vmatpush1.msra.mxu0 0.0
        %803 = vmatprep.subr.mxu0 0.0
        %804 = vmatpush1.msra.mxu0 0.0
        %805 = vmatprep.subr.mxu0 0.0
        %806 = vmatpush1.msra.mxu0 0.0
        %807 = vmatprep.subr.mxu0 0.0
        %808 = vmatpush1.msra.mxu0 0.0
        %809 = vmatprep.subr.mxu0 0.0
        %810 = vmatpush1.msra.mxu0 0.0
        %811 = vmatprep.subr.mxu0 0.0
        %812 = vmatpush1.msra.mxu0 0.0
        %813 = vmatprep.subr.mxu0 0.0
        %814 = vmatpush1.msra.mxu0 0.0
        %815 = vmatprep.subr.mxu0 0.0
        %816 = vmatpush1.msra.mxu0 0.0
        %817 = vmatprep.subr.mxu0 0.0
        %818 = vmatpush1.msra.mxu0 0.0
        %819 = vmatprep.subr.mxu0 0.0
        %820 = vmatpush1.msra.mxu0 0.0
        %821 = vmatprep.subr.mxu0 0.0
        %822 = vmatpush1.msra.mxu0 0.0
        %823 = vmatprep.subr.mxu0 0.0
        %824 = vmatpush1.msra.mxu0 0.0
        %825 = vmatprep.subr.mxu0 0.0
        %826 = vmatpush1.msra.mxu0 0.0
        %827 = vmatprep.subr.mxu0 0.0
        %828 = vmatpush1.msra.mxu0 0.0
        %829 = vmatprep.subr.mxu0 0.0
        %830 = vmatpush1.msra.mxu0 0.0
        %831 = vmatprep.subr.mxu0 0.0
        %832 = vmatpush1.msra.mxu0 0.0
        %833 = vmatprep.subr.mxu0 0.0
        %834 = vmatpush1.msra.mxu0 0.0
        %835 = vmatprep.subr.mxu0 0.0
        %836 = vmatpush1.msra.mxu0 0.0
        %837 = vmatprep.subr.mxu0 0.0
        %838 = vmatpush1.msra.mxu0 0.0
        %839 = vmatprep.subr.mxu0 0.0
        %840 = vmatpush1.msra.mxu0 0.0
        %841 = vmatprep.subr.mxu0 0.0
        %842 = vmatpush1.msra.mxu0 0.0
        %843 = vmatprep.mubr.f32.mxu0 0.0
        %844 = vmatmul.mubr.f32.gmra.mrb[0].mxu0 %v775
        %v845 = vpop.f32.mrb[0].mxu0
        %v846 = vadd.f32 0.0, %v845
        %v847 = vpop.f32.mrb[0].mxu0
        %848 = vmatprep.mubr.f32.mxu0 0.0
        %849 = vmatmul.mubr.f32.gmra.mrb[0].mxu0 %v777
        %v850 = vpop.f32.mrb[0].mxu0
        %v851 = vadd.f32 0.0, %v850
        %v852 = vpop.f32.mrb[0].mxu0
        %853 = vdwg.mxu0
        %v854 = vadd.f32 %v773, %v846
        %v855 = vadd.f32 %v774, %v851
        %vm857 = vcmask 1046528
        %v858 = vrot.slane %v389, 1
        %v859 = vrot.slane %v390, 1
        %v860 = vsel %vm857, %v858, %v859
        %v861 = vrot.slane %v391, 1
        %v862 = vsel %vm857, %v859, %v861
        %v863 = vsel %vm383, %v860, 0
        %v865 = vsel %vm383, %v862, 0
        %867 = vmatprep.subr.mxu0 0.0
        %868 = vmatpush1.msra.mxu0 %v412
        %869 = vmatprep.subr.mxu0 0.0
        %870 = vmatpush1.msra.mxu0 %v413
        %871 = vmatprep.subr.mxu0 0.0
        %872 = vmatpush1.msra.mxu0 %v414
        %873 = vmatprep.subr.mxu0 0.0
        %874 = vmatpush1.msra.mxu0 %v415
        %875 = vmatprep.subr.mxu0 0.0
        %876 = vmatpush1.msra.mxu0 0.0
        %877 = vmatprep.subr.mxu0 0.0
        %878 = vmatpush1.msra.mxu0 0.0
        %879 = vmatprep.subr.mxu0 0.0
        %880 = vmatpush1.msra.mxu0 0.0
        %881 = vmatprep.subr.mxu0 0.0
        %882 = vmatpush1.msra.mxu0 0.0
        %883 = vmatprep.subr.mxu0 0.0
        %884 = vmatpush1.msra.mxu0 0.0
        %885 = vmatprep.subr.mxu0 0.0
        %886 = vmatpush1.msra.mxu0 0.0
        %887 = vmatprep.subr.mxu0 0.0
        %888 = vmatpush1.msra.mxu0 0.0
        %889 = vmatprep.subr.mxu0 0.0
        %890 = vmatpush1.msra.mxu0 0.0
        %891 = vmatprep.subr.mxu0 0.0
        %892 = vmatpush1.msra.mxu0 0.0
        %893 = vmatprep.subr.mxu0 0.0
        %894 = vmatpush1.msra.mxu0 0.0
        %895 = vmatprep.subr.mxu0 0.0
        %896 = vmatpush1.msra.mxu0 0.0
        %897 = vmatprep.subr.mxu0 0.0
        %898 = vmatpush1.msra.mxu0 0.0
        %899 = vmatprep.subr.mxu0 0.0
        %900 = vmatpush1.msra.mxu0 0.0
        %901 = vmatprep.subr.mxu0 0.0
        %902 = vmatpush1.msra.mxu0 0.0
        %903 = vmatprep.subr.mxu0 0.0
        %904 = vmatpush1.msra.mxu0 0.0
        %905 = vmatprep.subr.mxu0 0.0
        %906 = vmatpush1.msra.mxu0 0.0
        %907 = vmatprep.subr.mxu0 0.0
        %908 = vmatpush1.msra.mxu0 0.0
        %909 = vmatprep.subr.mxu0 0.0
        %910 = vmatpush1.msra.mxu0 0.0
        %911 = vmatprep.subr.mxu0 0.0
        %912 = vmatpush1.msra.mxu0 0.0
        %913 = vmatprep.subr.mxu0 0.0
        %914 = vmatpush1.msra.mxu0 0.0
        %915 = vmatprep.subr.mxu0 0.0
        %916 = vmatpush1.msra.mxu0 0.0
        %917 = vmatprep.subr.mxu0 0.0
        %918 = vmatpush1.msra.mxu0 0.0
        %919 = vmatprep.subr.mxu0 0.0
        %920 = vmatpush1.msra.mxu0 0.0
        %921 = vmatprep.subr.mxu0 0.0
        %922 = vmatpush1.msra.mxu0 0.0
        %923 = vmatprep.subr.mxu0 0.0
        %924 = vmatpush1.msra.mxu0 0.0
        %925 = vmatprep.subr.mxu0 0.0
        %926 = vmatpush1.msra.mxu0 0.0
        %927 = vmatprep.subr.mxu0 0.0
        %928 = vmatpush1.msra.mxu0 0.0
        %929 = vmatprep.subr.mxu0 0.0
        %930 = vmatpush1.msra.mxu0 0.0
        %931 = vmatprep.mubr.f32.mxu0 0.0
        %932 = vmatmul.mubr.f32.gmra.mrb[0].mxu0 %v863
        %v933 = vpop.f32.mrb[0].mxu0
        %v934 = vadd.f32 0.0, %v933
        %v935 = vpop.f32.mrb[0].mxu0
        %936 = vmatprep.mubr.f32.mxu0 0.0
        %937 = vmatmul.mubr.f32.gmra.mrb[0].mxu0 %v865
        %v938 = vpop.f32.mrb[0].mxu0
        %v939 = vadd.f32 0.0, %v938
        %v940 = vpop.f32.mrb[0].mxu0
        %941 = vdwg.mxu0
        %v942 = vadd.f32 %v854, %v934
        %v943 = vadd.f32 %v855, %v939
        %vm944 = vcmask 1045504
        %v945 = vrot.slane %v389, 2
        %v946 = vrot.slane %v390, 2
        %v947 = vsel %vm944, %v945, %v946
        %v948 = vrot.slane %v391, 2
        %v949 = vsel %vm944, %v946, %v948
        %v950 = vsel %vm383, %v947, 0
        %v952 = vsel %vm383, %v949, 0
        %954 = vmatprep.subr.mxu0 0.0
        %955 = vmatpush1.msra.mxu0 %v416
        %956 = vmatprep.subr.mxu0 0.0
        %957 = vmatpush1.msra.mxu0 %v417
        %958 = vmatprep.subr.mxu0 0.0
        %959 = vmatpush1.msra.mxu0 %v418
        %960 = vmatprep.subr.mxu0 0.0
        %961 = vmatpush1.msra.mxu0 %v419
        %962 = vmatprep.subr.mxu0 0.0
        %963 = vmatpush1.msra.mxu0 0.0
        %964 = vmatprep.subr.mxu0 0.0
        %965 = vmatpush1.msra.mxu0 0.0
        %966 = vmatprep.subr.mxu0 0.0
        %967 = vmatpush1.msra.mxu0 0.0
        %968 = vmatprep.subr.mxu0 0.0
        %969 = vmatpush1.msra.mxu0 0.0
        %970 = vmatprep.subr.mxu0 0.0
        %971 = vmatpush1.msra.mxu0 0.0
        %972 = vmatprep.subr.mxu0 0.0
        %973 = vmatpush1.msra.mxu0 0.0
        %974 = vmatprep.subr.mxu0 0.0
        %975 = vmatpush1.msra.mxu0 0.0
        %976 = vmatprep.subr.mxu0 0.0
        %977 = vmatpush1.msra.mxu0 0.0
        %978 = vmatprep.subr.mxu0 0.0
        %979 = vmatpush1.msra.mxu0 0.0
        %980 = vmatprep.subr.mxu0 0.0
        %981 = vmatpush1.msra.mxu0 0.0
        %982 = vmatprep.subr.mxu0 0.0
        %983 = vmatpush1.msra.mxu0 0.0
        %984 = vmatprep.subr.mxu0 0.0
        %985 = vmatpush1.msra.mxu0 0.0
        %986 = vmatprep.subr.mxu0 0.0
        %987 = vmatpush1.msra.mxu0 0.0
        %988 = vmatprep.subr.mxu0 0.0
        %989 = vmatpush1.msra.mxu0 0.0
        %990 = vmatprep.subr.mxu0 0.0
        %991 = vmatpush1.msra.mxu0 0.0
        %992 = vmatprep.subr.mxu0 0.0
        %993 = vmatpush1.msra.mxu0 0.0
        %994 = vmatprep.subr.mxu0 0.0
        %995 = vmatpush1.msra.mxu0 0.0
        %996 = vmatprep.subr.mxu0 0.0
        %997 = vmatpush1.msra.mxu0 0.0
        %998 = vmatprep.subr.mxu0 0.0
        %999 = vmatpush1.msra.mxu0 0.0
        %1000 = vmatprep.subr.mxu0 0.0
        %1001 = vmatpush1.msra.mxu0 0.0
        %1002 = vmatprep.subr.mxu0 0.0
        %1003 = vmatpush1.msra.mxu0 0.0
        %1004 = vmatprep.subr.mxu0 0.0
        %1005 = vmatpush1.msra.mxu0 0.0
        %1006 = vmatprep.subr.mxu0 0.0
        %1007 = vmatpush1.msra.mxu0 0.0
        %1008 = vmatprep.subr.mxu0 0.0
        %1009 = vmatpush1.msra.mxu0 0.0
        %1010 = vmatprep.subr.mxu0 0.0
        %1011 = vmatpush1.msra.mxu0 0.0
        %1012 = vmatprep.subr.mxu0 0.0
        %1013 = vmatpush1.msra.mxu0 0.0
        %1014 = vmatprep.subr.mxu0 0.0
        %1015 = vmatpush1.msra.mxu0 0.0
        %1016 = vmatprep.subr.mxu0 0.0
        %1017 = vmatpush1.msra.mxu0 0.0
        %1018 = vmatprep.mubr.f32.mxu0 0.0
        %1019 = vmatmul.mubr.f32.gmra.mrb[0].mxu0 %v950
        %v1020 = vpop.f32.mrb[0].mxu0
        %v1021 = vadd.f32 0.0, %v1020
        %v1022 = vpop.f32.mrb[0].mxu0
        %1023 = vmatprep.mubr.f32.mxu0 0.0
        %1024 = vmatmul.mubr.f32.gmra.mrb[0].mxu0 %v952
        %v1025 = vpop.f32.mrb[0].mxu0
        %v1026 = vadd.f32 0.0, %v1025
        %v1027 = vpop.f32.mrb[0].mxu0
        %1028 = vdwg.mxu0
        %v1029 = vadd.f32 %v942, %v1021
        %v1030 = vadd.f32 %v943, %v1026
        %vm1031 = vcmask 1044480
        %v1032 = vrot.slane %v389, 3
        %v1033 = vrot.slane %v390, 3
        %v1034 = vsel %vm1031, %v1032, %v1033
        %v1035 = vrot.slane %v391, 3
        %v1036 = vsel %vm1031, %v1033, %v1035
        %v1037 = vsel %vm383, %v1034, 0
        %v1039 = vsel %vm383, %v1036, 0
        %1041 = vmatprep.subr.mxu0 0.0
        %1042 = vmatpush1.msra.mxu0 %v420
        %1043 = vmatprep.subr.mxu0 0.0
        %1044 = vmatpush1.msra.mxu0 %v421
        %1045 = vmatprep.subr.mxu0 0.0
        %1046 = vmatpush1.msra.mxu0 %v422
        %1047 = vmatprep.subr.mxu0 0.0
        %1048 = vmatpush1.msra.mxu0 %v423
        %1049 = vmatprep.subr.mxu0 0.0
        %1050 = vmatpush1.msra.mxu0 0.0
        %1051 = vmatprep.subr.mxu0 0.0
        %1052 = vmatpush1.msra.mxu0 0.0
        %1053 = vmatprep.subr.mxu0 0.0
        %1054 = vmatpush1.msra.mxu0 0.0
        %1055 = vmatprep.subr.mxu0 0.0
        %1056 = vmatpush1.msra.mxu0 0.0
        %1057 = vmatprep.subr.mxu0 0.0
        %1058 = vmatpush1.msra.mxu0 0.0
        %1059 = vmatprep.subr.mxu0 0.0
        %1060 = vmatpush1.msra.mxu0 0.0
        %1061 = vmatprep.subr.mxu0 0.0
        %1062 = vmatpush1.msra.mxu0 0.0
        %1063 = vmatprep.subr.mxu0 0.0
        %1064 = vmatpush1.msra.mxu0 0.0
        %1065 = vmatprep.subr.mxu0 0.0
        %1066 = vmatpush1.msra.mxu0 0.0
        %1067 = vmatprep.subr.mxu0 0.0
        %1068 = vmatpush1.msra.mxu0 0.0
        %1069 = vmatprep.subr.mxu0 0.0
        %1070 = vmatpush1.msra.mxu0 0.0
        %1071 = vmatprep.subr.mxu0 0.0
        %1072 = vmatpush1.msra.mxu0 0.0
        %1073 = vmatprep.subr.mxu0 0.0
        %1074 = vmatpush1.msra.mxu0 0.0
        %1075 = vmatprep.subr.mxu0 0.0
        %1076 = vmatpush1.msra.mxu0 0.0
        %1077 = vmatprep.subr.mxu0 0.0
        %1078 = vmatpush1.msra.mxu0 0.0
        %1079 = vmatprep.subr.mxu0 0.0
        %1080 = vmatpush1.msra.mxu0 0.0
        %1081 = vmatprep.subr.mxu0 0.0
        %1082 = vmatpush1.msra.mxu0 0.0
        %1083 = vmatprep.subr.mxu0 0.0
        %1084 = vmatpush1.msra.mxu0 0.0
        %1085 = vmatprep.subr.mxu0 0.0
        %1086 = vmatpush1.msra.mxu0 0.0
        %1087 = vmatprep.subr.mxu0 0.0
        %1088 = vmatpush1.msra.mxu0 0.0
        %1089 = vmatprep.subr.mxu0 0.0
        %1090 = vmatpush1.msra.mxu0 0.0
        %1091 = vmatprep.subr.mxu0 0.0
        %1092 = vmatpush1.msra.mxu0 0.0
        %1093 = vmatprep.subr.mxu0 0.0
        %1094 = vmatpush1.msra.mxu0 0.0
        %1095 = vmatprep.subr.mxu0 0.0
        %1096 = vmatpush1.msra.mxu0 0.0
        %1097 = vmatprep.subr.mxu0 0.0
        %1098 = vmatpush1.msra.mxu0 0.0
        %1099 = vmatprep.subr.mxu0 0.0
        %1100 = vmatpush1.msra.mxu0 0.0
        %1101 = vmatprep.subr.mxu0 0.0
        %1102 = vmatpush1.msra.mxu0 0.0
        %1103 = vmatprep.subr.mxu0 0.0
        %1104 = vmatpush1.msra.mxu0 0.0
        %1105 = vmatprep.mubr.f32.mxu0 0.0
        %1106 = vmatmul.mubr.f32.gmra.mrb[0].mxu0 %v1037
        %v1107 = vpop.f32.mrb[0].mxu0
        %v1108 = vadd.f32 0.0, %v1107
        %v1109 = vpop.f32.mrb[0].mxu0
        %1110 = vmatprep.mubr.f32.mxu0 0.0
        %1111 = vmatmul.mubr.f32.gmra.mrb[0].mxu0 %v1039
        %v1112 = vpop.f32.mrb[0].mxu0
        %v1113 = vadd.f32 0.0, %v1112
        %v1114 = vpop.f32.mrb[0].mxu0
        %1115 = vdwg.mxu0
        %v1116 = vadd.f32 %v1029, %v1108
        %v1117 = vadd.f32 %v1030, %v1113
        %v1118 = vrot.slane %v391, 4
        %v1119 = vsel %vm516, %v520, %v1118
        %v1120 = vsel %vm383, %v1119, 0
        %1122 = vmatprep.subr.mxu0 0.0
        %1123 = vmatpush1.msra.mxu0 %v424
        %1124 = vmatprep.subr.mxu0 0.0
        %1125 = vmatpush1.msra.mxu0 %v425
        %1126 = vmatprep.subr.mxu0 0.0
        %1127 = vmatpush1.msra.mxu0 %v426
        %1128 = vmatprep.subr.mxu0 0.0
        %1129 = vmatpush1.msra.mxu0 %v427
        %1130 = vmatprep.subr.mxu0 0.0
        %1131 = vmatpush1.msra.mxu0 0.0
        %1132 = vmatprep.subr.mxu0 0.0
        %1133 = vmatpush1.msra.mxu0 0.0
        %1134 = vmatprep.subr.mxu0 0.0
        %1135 = vmatpush1.msra.mxu0 0.0
        %1136 = vmatprep.subr.mxu0 0.0
        %1137 = vmatpush1.msra.mxu0 0.0
        %1138 = vmatprep.subr.mxu0 0.0
        %1139 = vmatpush1.msra.mxu0 0.0
        %1140 = vmatprep.subr.mxu0 0.0
        %1141 = vmatpush1.msra.mxu0 0.0
        %1142 = vmatprep.subr.mxu0 0.0
        %1143 = vmatpush1.msra.mxu0 0.0
        %1144 = vmatprep.subr.mxu0 0.0
        %1145 = vmatpush1.msra.mxu0 0.0
        %1146 = vmatprep.subr.mxu0 0.0
        %1147 = vmatpush1.msra.mxu0 0.0
        %1148 = vmatprep.subr.mxu0 0.0
        %1149 = vmatpush1.msra.mxu0 0.0
        %1150 = vmatprep.subr.mxu0 0.0
        %1151 = vmatpush1.msra.mxu0 0.0
        %1152 = vmatprep.subr.mxu0 0.0
        %1153 = vmatpush1.msra.mxu0 0.0
        %1154 = vmatprep.subr.mxu0 0.0
        %1155 = vmatpush1.msra.mxu0 0.0
        %1156 = vmatprep.subr.mxu0 0.0
        %1157 = vmatpush1.msra.mxu0 0.0
        %1158 = vmatprep.subr.mxu0 0.0
        %1159 = vmatpush1.msra.mxu0 0.0
        %1160 = vmatprep.subr.mxu0 0.0
        %1161 = vmatpush1.msra.mxu0 0.0
        %1162 = vmatprep.subr.mxu0 0.0
        %1163 = vmatpush1.msra.mxu0 0.0
        %1164 = vmatprep.subr.mxu0 0.0
        %1165 = vmatpush1.msra.mxu0 0.0
        %1166 = vmatprep.subr.mxu0 0.0
        %1167 = vmatpush1.msra.mxu0 0.0
        %1168 = vmatprep.subr.mxu0 0.0
        %1169 = vmatpush1.msra.mxu0 0.0
        %1170 = vmatprep.subr.mxu0 0.0
        %1171 = vmatpush1.msra.mxu0 0.0
        %1172 = vmatprep.subr.mxu0 0.0
        %1173 = vmatpush1.msra.mxu0 0.0
        %1174 = vmatprep.subr.mxu0 0.0
        %1175 = vmatpush1.msra.mxu0 0.0
        %1176 = vmatprep.subr.mxu0 0.0
        %1177 = vmatpush1.msra.mxu0 0.0
        %1178 = vmatprep.subr.mxu0 0.0
        %1179 = vmatpush1.msra.mxu0 0.0
        %1180 = vmatprep.subr.mxu0 0.0
        %1181 = vmatpush1.msra.mxu0 0.0
        %1182 = vmatprep.subr.mxu0 0.0
        %1183 = vmatpush1.msra.mxu0 0.0
        %1184 = vmatprep.subr.mxu0 0.0
        %1185 = vmatpush1.msra.mxu0 0.0
        %1186 = vmatprep.mubr.f32.mxu0 0.0
        %1187 = vmatmul.mubr.f32.gmra.mrb[0].mxu0 %v524
        %v1188 = vpop.f32.mrb[0].mxu0
        %v1189 = vadd.f32 0.0, %v1188
        %v1190 = vpop.f32.mrb[0].mxu0
        %1191 = vmatprep.mubr.f32.mxu0 0.0
        %1192 = vmatmul.mubr.f32.gmra.mrb[0].mxu0 %v1120
        %v1193 = vpop.f32.mrb[0].mxu0
        %v1194 = vadd.f32 0.0, %v1193
        %v1195 = vpop.f32.mrb[0].mxu0
        %1196 = vdwg.mxu0
        %v1197 = vadd.f32 %v1116, %v1189
        %v1198 = vadd.f32 %v1117, %v1194
        %v1199 = vld [vmem:[%s3] sm:$0x1]
        %v1201 = vlaneseq
        %v1202 = vshrl.u32 %v1201, 7
        %v1203 = vsub.s32 0, %v1202
        %v1204 = vrot.slane %v1199, %v1203
        %v1206 = vadd.f32 %v1197, %v1204
        %v1207 = vadd.f32 %v1198, %v1204
        %v1208 = vmax.f32 %v1206, 0.0
        %v1209 = vmax.f32 %v1207, 0.0
        %v1210 = vld [vmem:[%s4] sm:$0xff]
        %v1211 = vld [vmem:[%s4 + $0x8] sm:$0xff]
        %v1212 = vld [vmem:[%s4 + $0x10] sm:$0xff]
        %v1213 = vld [vmem:[%s4 + $0x18] sm:$0xff]
        %v1214 = vld [vmem:[%s4 + $0x20] sm:$0xff]
        %v1215 = vld [vmem:[%s4 + $0x28] sm:$0xff]
        %v1216 = vld [vmem:[%s4 + $0x30] sm:$0xff]
        %v1217 = vld [vmem:[%s4 + $0x38] sm:$0xff]
        %v1218 = vld [vmem:[%s5] sm:$0x1]
        %v1220 = vlaneseq
        %v1221 = vshrl.u32 %v1220, 7
        %v1222 = vsub.s32 0, %v1221
        %v1223 = vrot.slane %v1218, %v1222
        %vm1225 = vcmask 523264
        %v1227 = vsel %vm1225, %v1208, 0
        %v1230 = vsel %vm1225, %v1209, 0
        %1232 = vmatprep.subr.mxu0 0.0
        %1233 = vmatpush1.msra.mxu0 %v1210
        %1234 = vmatprep.subr.mxu0 0.0
        %1235 = vmatpush1.msra.mxu0 %v1211
        %1236 = vmatprep.subr.mxu0 0.0
        %1237 = vmatpush1.msra.mxu0 %v1212
        %1238 = vmatprep.subr.mxu0 0.0
        %1239 = vmatpush1.msra.mxu0 %v1213
        %1240 = vmatprep.subr.mxu0 0.0
        %1241 = vmatpush1.msra.mxu0 %v1214
        %1242 = vmatprep.subr.mxu0 0.0
        %1243 = vmatpush1.msra.mxu0 %v1215
        %1244 = vmatprep.subr.mxu0 0.0
        %1245 = vmatpush1.msra.mxu0 %v1216
        %1246 = vmatprep.subr.mxu0 0.0
        %1247 = vmatpush1.msra.mxu0 %v1217
        %1248 = vmatprep.subr.mxu0 0.0
        %1249 = vmatpush1.msra.mxu0 0.0
        %1250 = vmatprep.subr.mxu0 0.0
        %1251 = vmatpush1.msra.mxu0 0.0
        %1252 = vmatprep.subr.mxu0 0.0
        %1253 = vmatpush1.msra.mxu0 0.0
        %1254 = vmatprep.subr.mxu0 0.0
        %1255 = vmatpush1.msra.mxu0 0.0
        %1256 = vmatprep.subr.mxu0 0.0
        %1257 = vmatpush1.msra.mxu0 0.0
        %1258 = vmatprep.subr.mxu0 0.0
        %1259 = vmatpush1.msra.mxu0 0.0
        %1260 = vmatprep.subr.mxu0 0.0
        %1261 = vmatpush1.msra.mxu0 0.0
        %1262 = vmatprep.subr.mxu0 0.0
        %1263 = vmatpush1.msra.mxu0 0.0
        %1264 = vmatprep.subr.mxu0 0.0
        %1265 = vmatpush1.msra.mxu0 0.0
        %1266 = vmatprep.subr.mxu0 0.0
        %1267 = vmatpush1.msra.mxu0 0.0
        %1268 = vmatprep.subr.mxu0 0.0
        %1269 = vmatpush1.msra.mxu0 0.0
        %1270 = vmatprep.subr.mxu0 0.0
        %1271 = vmatpush1.msra.mxu0 0.0
        %1272 = vmatprep.subr.mxu0 0.0
        %1273 = vmatpush1.msra.mxu0 0.0
        %1274 = vmatprep.subr.mxu0 0.0
        %1275 = vmatpush1.msra.mxu0 0.0
        %1276 = vmatprep.subr.mxu0 0.0
        %1277 = vmatpush1.msra.mxu0 0.0
        %1278 = vmatprep.subr.mxu0 0.0
        %1279 = vmatpush1.msra.mxu0 0.0
        %1280 = vmatprep.subr.mxu0 0.0
        %1281 = vmatpush1.msra.mxu0 0.0
        %1282 = vmatprep.subr.mxu0 0.0
        %1283 = vmatpush1.msra.mxu0 0.0
        %1284 = vmatprep.subr.mxu0 0.0
        %1285 = vmatpush1.msra.mxu0 0.0
        %1286 = vmatprep.subr.mxu0 0.0
        %1287 = vmatpush1.msra.mxu0 0.0
        %1288 = vmatprep.subr.mxu0 0.0
        %1289 = vmatpush1.msra.mxu0 0.0
        %1290 = vmatprep.subr.mxu0 0.0
        %1291 = vmatpush1.msra.mxu0 0.0
        %1292 = vmatprep.subr.mxu0 0.0
        %1293 = vmatpush1.msra.mxu0 0.0
        %1294 = vmatprep.subr.mxu0 0.0
        %1295 = vmatpush1.msra.mxu0 0.0
        %1296 = vmatprep.mubr.f32.mxu0 0.0
        %1297 = vmatmul.mubr.f32.gmra.mrb[0].mxu0 %v1227
        %v1298 = vpop.f32.mrb[0].mxu0
        %v1299 = vadd.f32 %v1223, %v1298
        %v1300 = vpop.f32.mrb[0].mxu0
        %1301 = vmatprep.mubr.f32.mxu0 0.0
        %1302 = vmatmul.mubr.f32.gmra.mrb[0].mxu0 %v1230
        %v1303 = vpop.f32.mrb[0].mxu0
        %v1304 = vadd.f32 %v1223, %v1303
        %v1305 = vpop.f32.mrb[0].mxu0
        %1306 = vdwg.mxu0
        %v1307 = vld [vmem:[%s368] sm:$0xff]
        %v1308 = vld [vmem:[%s368 + $0x8] sm:$0xff]
        %v1309 = vadd.f32 %v1299, %v1307
        %v1310 = vadd.f32 %v1304, %v1308
        %v1311 = vsel %vm383, %v1309, 0.0
        %1312 = vadd.xlane.f32.xlu0 %v1311
        %v1313 = vpop.xlane.xlu0 %1312
        %v1314 = vsel %vm383, %v1310, 0.0
        %1315 = vadd.xlane.f32.xlu0 %v1314
        %v1316 = vpop.xlane.xlu0 %1315
        %v1317 = vrcp.pop 32.0
        %v1318 = vmul.f32 %v1313, %v1317
        %v1319 = vmul.f32 %v1316, %v1317
        %v1320 = vsub.f32 %v1309, %v1318
        %v1321 = vsub.f32 %v1310, %v1319
        %v1322 = vmul.f32 %v1320, %v1320
        %v1323 = vmul.f32 %v1321, %v1321
        %v1324 = vsel %vm383, %v1322, 0.0
        %1325 = vadd.xlane.f32.xlu0 %v1324
        %v1326 = vpop.xlane.xlu0 %1325
        %v1327 = vsel %vm383, %v1323, 0.0
        %1328 = vadd.xlane.f32.xlu0 %v1327
        %v1329 = vpop.xlane.xlu0 %1328
        %v1330 = vmul.f32 %v1326, %v1317
        %v1331 = vmul.f32 %v1329, %v1317
        %v1332 = vadd.f32 %v1330, 1e-05
        %v1333 = vadd.f32 %v1331, 1e-05
        %v1334 = vrsqrt.pop %v1332
        %v1335 = vrsqrt.pop %v1333
        %v1336 = vmul.f32 %v1320, %v1334
        %v1337 = vmul.f32 %v1321, %v1335
        %v1338 = vld [vmem:[%s6] sm:$0x1]
        %v1340 = vlaneseq
        %v1341 = vshrl.u32 %v1340, 7
        %v1342 = vsub.s32 0, %v1341
        %v1343 = vrot.slane %v1338, %v1342
        %v1345 = vmul.f32 %v1336, %v1343
        %v1346 = vmul.f32 %v1337, %v1343
        %v1347 = vld [vmem:[%s7] sm:$0x1]
        %v1349 = vlaneseq
        %v1350 = vshrl.u32 %v1349, 7
        %v1351 = vsub.s32 0, %v1350
        %v1352 = vrot.slane %v1347, %v1351
        %v1354 = vadd.f32 %v1345, %v1352
        %v1355 = vadd.f32 %v1346, %v1352
        %1356 = vst.msk [vmem:[%s359] sm:$0xff] %vm383, %v1354
        %1357 = vst.msk [vmem:[%s359 + $0x8] sm:$0xff] %vm383, %v1355
        %s1358 = sand.u32 %s227, 1
        %s1359 = scalar_lea.sflag [#allocation5], %s1358
        %s1360 = sand.u32 %s227, 1
        %s1361 = smul.addr %s1360, 16
        %s1362 = scalar_lea.vmem [#allocation6], %s1361
        // Predicated region
        $region57: #{tpu_custom_call.1} parent=51 // pred_check
          %p1363 = pneg %p237
        $region58: #{tpu_custom_call.1} parent=51 // pred_check_branch
          %1365 = sbr.rel (%p1363) target = $region60
        $region59: #{tpu_custom_call.1} parent=51 // pred_region
          %s1366 = smul.u32 2, %s28
          %s1368 = ssub.s32 256, 256
          %1369 = vsyncadd %s1359, %s1368
          %s1370 = smul.addr %s27, 2
          %s1371 = sadd.s32 %s1366, %s1370
          %s1372 = smul.addr %s1371, 128
          %s1373 = scalar_lea.hbm %s8, %s1372
          %s1374 = sshll.u32 %s1362, 4
          %s1375 = int_to_ptr.vmem [resolvable:$true] %s1374
          %1380 = dma.vmem_to_hbm [thread:$0]  %s1375, 256, %s1373, %s1359, 128, 128, 8
        $region60: #{tpu_custom_call.1} parent=51 // pred_fallthru
          _
      $region52: #{tpu_custom_call.1} parent=5 // pred_fallthru
        _
      %p1381 = scmp.le.s32.totalorder 2, %s18
      // Predicated region
      $region61: #{tpu_custom_call.1} parent=5 // pred_check
        %p1382 = pneg %p1381
      $region62: #{tpu_custom_call.1} parent=5 // pred_check_branch
        %1384 = sbr.rel (%p1382) target = $region64
      $region63: #{tpu_custom_call.1} parent=5 // pred_region
        %s1385 = ssub.s32 %s18, 2
        // Predicated region
        $region65: #{tpu_custom_call.1} parent=63 // pred_check
          %p1386 = pneg %p243
        $region66: #{tpu_custom_call.1} parent=63 // pred_check_branch
          %1388 = sbr.rel (%p1386) target = $region68
        $region67: #{tpu_custom_call.1} parent=63 // pred_region
          %s1389 = sand.u32 %s228, 1
          %s1390 = scalar_lea.sflag [#allocation5], %s1389
          %s1391 = sand.u32 %s228, 1
          %s1392 = smul.addr %s1391, 16
          %s1393 = scalar_lea.vmem [#allocation6], %s1392
          %1394 = dma.done %s1390, 256
        $region68: #{tpu_custom_call.1} parent=63 // pred_fallthru
          _
      $region64: #{tpu_custom_call.1} parent=5 // pred_fallthru
        _
    $region6: #{tpu_custom_call.1} parent=1 // loop_footer
      %s22 = sadd.s32 1, %s18
    $region7: #{tpu_custom_call.1} parent=1 // loop_footer_branch
      %17 = sbr.rel target = $region3
    $region8: #{tpu_custom_call.1} parent=1 // loop_exit
      _
    %1395 = vsyncpa [#allocation4], 1
    %s1396 = scalar_lea.sflag [#allocation4], 1
    %1397 = vsyncpa %s1396, 1
    %1398 = vsyncpa [#allocation5], 1
    %s1399 = scalar_lea.sflag [#allocation5], 1
    %1400 = vsyncpa %s1399, 1

</llo_original>
